<compile_context>
chip_gen: v7x
topology: tpu7x:2x2x1
jax: 0.10.0
libtpu: 0.0.40
codegen_flags: <defaults>
</compile_context>

<pallas_src>
import functools

import jax
import jax.numpy as jnp
from jax.experimental import pallas as pl
from jax.experimental.pallas import tpu as pltpu


# ----------------------------------------------------------------------------
# In-kernel helpers
# ----------------------------------------------------------------------------
def _conv3x3(h, w_ref, masks, ones_row, W):
    """3x3 SAME conv (+ folded bias) on a (Cin, nb*HW) activation slab.

    Taps are built with XLU lane rotations (pltpu.roll) and multiplied by
    precomputed boundary-validity masks, so SAME padding never materializes a
    padded buffer and no unaligned VMEM slices are taken.  One wide MXU matmul
    per conv layer; bias enters via the all-ones patch row.
    """
    Cin, nbhw = h.shape
    up, down, left, right, ul, ur, dl, dr = masks

    def rot(a, off):
        # rot(a, off)[p] == a[(p + off) mod nbhw]   (XLU lane rotation)
        return a if off == 0 else pltpu.roll(a, shift=(-off) % nbhw, axis=1)

    g_up = rot(h, -W)        # row above  (ky = -1)
    g_dn = rot(h, +W)        # row below  (ky = +1)

    taps = [
        rot(g_up, -1) * ul,   g_up * up,   rot(g_up, +1) * ur,     # ky = -1
        rot(h,    -1) * left, h,           rot(h,    +1) * right,  # ky =  0 (center tap unmasked)
        rot(g_dn, -1) * dl,   g_dn * down, rot(g_dn, +1) * dr,     # ky = +1
    ]
    patches = jnp.concatenate(taps + [ones_row], axis=0)           # (9*Cin+1, nb*HW)
    # bf16 operands on the MXU (v6e/v7x native rate), f32 accumulation.
    return jnp.dot(w_ref[...], patches.astype(w_ref.dtype),
                   preferred_element_type=jnp.float32)


def _fused_kernel(x_ref, w1_ref, w2_ref, w3_ref, tail_ref, o_ref, *, nb, C, H, W):
    """nb images per step: conv->relu->conv->relu->conv->tanh, residual,
    per-channel affine, clamp.  All intermediates stay in VMEM."""
    HW = H * W
    nbhw = nb * HW
    f32 = jnp.float32

    # ---- boundary masks, generated in-kernel (no extra input stream) --------
    pos = jax.lax.broadcasted_iota(jnp.int32, (1, nbhw), 1)
    pin = pos % HW                            # position within its own image
    col = pin % W
    up    = (pin >= W).astype(f32)            # row above exists     (ky = -1)
    down  = (pin < HW - W).astype(f32)        # row below exists     (ky = +1)
    left  = (col >= 1).astype(f32)            # left column exists   (kx = -1)
    right = (col <= W - 2).astype(f32)        # right column exists  (kx = +1)
    masks = (up, down, left, right, up * left, up * right, down * left, down * right)
    ones_row = jnp.ones((1, nbhw), f32)

    # ---- lane-concatenate this step's images: (nb*C, HW) -> (C, nb*HW) ------
    xs = x_ref[0]
    if nb > 1:
        x = jnp.concatenate([xs[b * C:(b + 1) * C, :] for b in range(nb)], axis=1)
    else:
        x = xs

    # ---- color_net (biases folded into the matmuls) --------------------------
    h = jnp.maximum(_conv3x3(x, w1_ref, masks, ones_row, W), 0.0)   # (32, nb*HW)
    h = jnp.maximum(_conv3x3(h, w2_ref, masks, ones_row, W), 0.0)   # (32, nb*HW)
    delta = jnp.tanh(_conv3x3(h, w3_ref, masks, ones_row, W))       # (3,  nb*HW)

    # ---- residual + per-channel affine + clamp ------------------------------
    adj   = tail_ref[:, 0:1]          # channel_adjust
    adj02 = tail_ref[:, 1:2]          # 0.2 * channel_adjust
    cb    = tail_ref[:, 2:3]          # channel_bias
    # (x + 0.2*delta)*adj + cb  ==  x*adj + (0.2*adj)*delta + cb
    out = jnp.clip(x * adj + adj02 * delta + cb, 0.0, 1.0)          # (3, nb*HW)

    # ---- back to the dense (nb*C, HW) output slab ----------------------------
    if nb > 1:
        o_ref[0] = jnp.concatenate(
            [out[:, b * HW:(b + 1) * HW] for b in range(nb)], axis=0)
    else:
        o_ref[0] = out


# ----------------------------------------------------------------------------
# Wrapper
# ----------------------------------------------------------------------------
def simple_color_transform(x_nchw, params, *, images_per_step=None):
    """Forward pass. x_nchw: (N, 3, H, W) float32 -> (N, 3, H, W) float32."""
    N, C, H, W = x_nchw.shape
    HW = H * W
    x_f32 = x_nchw.astype(jnp.float32)

    # Images packed per grid step along the 128-lane axis: fewer/fatter grid
    # steps amortize the ~0.35us fixed step cost, give bigger DMAs, a denser
    # output slab, and a wider MXU N dimension.  Needs HW % 128 == 0.
    if images_per_step is None:
        if HW % 128 == 0:
            max_lanes = 4096               # keeps the (289, nb*HW) f32 patch matrix < ~5 MiB
            nb = max(1, min(N, max_lanes // HW))
            while N % nb:
                nb -= 1
        else:
            nb = 1   # TODO(synk): pad HW to a lane multiple to pack odd-sized images
    else:
        nb = images_per_step
        assert N % nb == 0
    num_steps = N // nb

    x_in = x_f32.reshape(num_steps, nb * C, HW)            # free reshape (contiguous)

    adj = params["channel_adjust"]
    tail = jnp.stack([adj, 0.2 * adj, params["channel_bias"]], axis=1)   # (3, 3) f32

    kernel = functools.partial(_fused_kernel, nb=nb, C=C, H=H, W=W)
    out = pl.pallas_call(
        kernel,
        out_shape=jax.ShapeDtypeStruct((num_steps, nb * C, HW), jnp.float32),
        grid=(num_steps,),
        in_specs=[
            pl.BlockSpec((1, nb * C, HW), lambda s: (s, 0, 0)),        # x slab
            pl.BlockSpec(params["w1_aug"].shape, lambda s: (0, 0)),    # (32, 28)  bf16
            pl.BlockSpec(params["w2_aug"].shape, lambda s: (0, 0)),    # (32, 289) bf16
            pl.BlockSpec(params["w3_aug"].shape, lambda s: (0, 0)),    # (3, 289)  bf16
            pl.BlockSpec((3, 3), lambda s: (0, 0)),                    # adj | 0.2*adj | bias
        ],
        out_specs=pl.BlockSpec((1, nb * C, HW), lambda s: (s, 0, 0)),
        compiler_params=pltpu.CompilerParams(
            dimension_semantics=("parallel",)),
        # TODO(synk): for large images, row-tile with a 1-row halo and set
        # vmem_limit_bytes against v7x's 64 MiB VMEM (patch matrix = 9x tile).
    )(x_in, params["w1_aug"], params["w2_aug"], params["w3_aug"], tail)
    return out.reshape(N, C, H, W)


# ----------------------------------------------------------------------------
# Deterministic parameter init
# ----------------------------------------------------------------------------
def init_params(key, mxu_dtype=jnp.bfloat16):
    ks = jax.random.split(key, 7)

    def conv_w(k, cin, cout):
        return jax.random.normal(k, (3, 3, cin, cout), jnp.float32) * (
            1.0 / (3.0 * (cin ** 0.5)))

    w1 = conv_w(ks[0], 3, 32)
    w2 = conv_w(ks[1], 32, 32)
    w3 = conv_w(ks[2], 32, 3)
    b1 = 0.05 * jax.random.normal(ks[3], (32,), jnp.float32)
    b2 = 0.05 * jax.random.normal(ks[4], (32,), jnp.float32)
    b3 = 0.05 * jax.random.normal(ks[5], (3,), jnp.float32)

    def flat_aug(w_hwio, b):
        # (3,3,Cin,Cout) -> (Cout, 9*Cin) with column order (ky, kx, cin),
        # then the bias folded in as an extra last column (paired with the
        # all-ones patch row inside the kernel).
        wf = jnp.transpose(w_hwio, (3, 0, 1, 2)).reshape(w_hwio.shape[3], -1)
        return jnp.concatenate([wf, b[:, None]], axis=1).astype(mxu_dtype)

    return {
        "w1_aug": flat_aug(w1, b1),
        "w2_aug": flat_aug(w2, b2),
        "w3_aug": flat_aug(w3, b3),
        "channel_adjust": jnp.ones((3,), jnp.float32)
                          + 0.1 * jax.random.normal(ks[6], (3,), jnp.float32),
        "channel_bias": jnp.full((3,), 0.02, jnp.float32),
        # f32 copies kept only for the pure-JAX reference check
        "_w1": w1, "_w2": w2, "_w3": w3, "_b1": b1, "_b2": b2, "_b3": b3,
    }


# ----------------------------------------------------------------------------
# Pure-JAX reference (correctness check only)
# ----------------------------------------------------------------------------
def _reference(x_nchw, p):
    x = jnp.transpose(x_nchw, (0, 2, 3, 1))
    dn = ("NHWC", "HWIO", "NHWC")
    conv = lambda a, w: jax.lax.conv_general_dilated(a, w, (1, 1), "SAME",
                                                     dimension_numbers=dn)
    h1 = jax.nn.relu(conv(x, p["_w1"]) + p["_b1"])
    h2 = jax.nn.relu(conv(h1, p["_w2"]) + p["_b2"])
    delta = jnp.tanh(conv(h2, p["_w3"]) + p["_b3"])
    corrected = (x + 0.2 * delta) * p["channel_adjust"] + p["channel_bias"]
    out = jnp.clip(corrected, 0.0, 1.0)
    return jnp.transpose(out, (0, 3, 1, 2))


if __name__ == "__main__":
    key = jax.random.PRNGKey(0)
    kx, kp = jax.random.split(key)

    # batch=2, 3 channels (RGB), 16x16 images in [0, 1]
    x = jax.random.uniform(kx, (2, 3, 16, 16), jnp.float32)
    params = init_params(kp)

    out = jax.block_until_ready(simple_color_transform(x, params))
    ref = jax.block_until_ready(_reference(x, params))

    assert out.shape == (2, 3, 16, 16)
    # bf16 MXU operands (f32 accumulation) -> tolerance deliberately loosened.
    assert jnp.allclose(out, ref, atol=1e-2, rtol=1e-2), \
        f"mismatch vs reference: {float(jnp.max(jnp.abs(out - ref)))}"

    print("KERNEL_OK")
</pallas_src>

<mosaic_0001>
module attributes {stable_mosaic.version = 11 : i64} {
  func.func @_fused_kernel(%arg0: i32, %arg1: memref<1x6x256xf32, #tpu.memory_space<vmem>>, %arg2: memref<32x28xbf16, #tpu.memory_space<vmem>>, %arg3: memref<32x289xbf16, #tpu.memory_space<vmem>>, %arg4: memref<3x289xbf16, #tpu.memory_space<vmem>>, %arg5: memref<3x3xf32, #tpu.memory_space<vmem>>, %arg6: memref<1x6x256xf32, #tpu.memory_space<vmem>>) attributes {dimension_semantics = [#tpu.dimension_semantics<parallel>], iteration_bounds = array<i64: 1>, scalar_prefetch = 0 : i64, scratch_operands = 0 : i64, tpu.core_type = #tpu.core_type<tc>, window_params = [{transform_indices = @transform_0, window_bounds = array<i64: 1, 6, 256>}, {pipeline_mode = #tpu.pipeline_mode<synchronous>, transform_indices = @transform_1, window_bounds = array<i64: 32, 28>}, {pipeline_mode = #tpu.pipeline_mode<synchronous>, transform_indices = @transform_2, window_bounds = array<i64: 32, 289>}, {pipeline_mode = #tpu.pipeline_mode<synchronous>, transform_indices = @transform_3, window_bounds = array<i64: 3, 289>}, {pipeline_mode = #tpu.pipeline_mode<synchronous>, transform_indices = @transform_4, window_bounds = array<i64: 3, 3>}, {transform_indices = @transform_5, window_bounds = array<i64: 1, 6, 256>}]} {
    %0 = tpu.iota {dimensions = array<i32: 1>} : vector<1x512xi32>
    %c256_i32 = arith.constant 256 : i32
    %c0_i32 = arith.constant 0 : i32
    %1 = arith.cmpi eq, %c256_i32, %c0_i32 : i32
    %c1_i32 = arith.constant 1 : i32
    %2 = arith.select %1, %c1_i32, %c256_i32 : i32
    %3 = vector.broadcast %2 : i32 to vector<1x512xi32>
    %4 = arith.remsi %0, %3 : vector<1x512xi32>
    %c0_i32_0 = arith.constant 0 : i32
    %5 = vector.broadcast %c0_i32_0 : i32 to vector<1x512xi32>
    %6 = arith.cmpi ne, %4, %5 : vector<1x512xi32>
    %c0_i32_1 = arith.constant 0 : i32
    %7 = vector.broadcast %c0_i32_1 : i32 to vector<1x512xi32>
    %8 = arith.cmpi slt, %4, %7 : vector<1x512xi32>
    %c0_i32_2 = arith.constant 0 : i32
    %9 = arith.cmpi slt, %2, %c0_i32_2 : i32
    %10 = vector.broadcast %9 : i1 to vector<1x512xi1>
    %11 = vector.broadcast %10 : vector<1x512xi1> to vector<1x512xi1>
    %12 = arith.xori %8, %11 : vector<1x512xi1>
    %13 = arith.andi %12, %6 : vector<1x512xi1>
    %14 = vector.broadcast %2 : i32 to vector<1x512xi32>
    %15 = arith.addi %4, %14 : vector<1x512xi32>
    %16 = arith.select %13, %15, %4 : vector<1x512xi1>, vector<1x512xi32>
    %c16_i32 = arith.constant 16 : i32
    %c0_i32_3 = arith.constant 0 : i32
    %17 = arith.cmpi eq, %c16_i32, %c0_i32_3 : i32
    %c1_i32_4 = arith.constant 1 : i32
    %18 = arith.select %17, %c1_i32_4, %c16_i32 : i32
    %19 = vector.broadcast %18 : i32 to vector<1x512xi32>
    %20 = arith.remsi %16, %19 : vector<1x512xi32>
    %c0_i32_5 = arith.constant 0 : i32
    %21 = vector.broadcast %c0_i32_5 : i32 to vector<1x512xi32>
    %22 = arith.cmpi ne, %20, %21 : vector<1x512xi32>
    %c0_i32_6 = arith.constant 0 : i32
    %23 = vector.broadcast %c0_i32_6 : i32 to vector<1x512xi32>
    %24 = arith.cmpi slt, %20, %23 : vector<1x512xi32>
    %c0_i32_7 = arith.constant 0 : i32
    %25 = arith.cmpi slt, %18, %c0_i32_7 : i32
    %26 = vector.broadcast %25 : i1 to vector<1x512xi1>
    %27 = vector.broadcast %26 : vector<1x512xi1> to vector<1x512xi1>
    %28 = arith.xori %24, %27 : vector<1x512xi1>
    %29 = arith.andi %28, %22 : vector<1x512xi1>
    %30 = vector.broadcast %18 : i32 to vector<1x512xi32>
    %31 = arith.addi %20, %30 : vector<1x512xi32>
    %32 = arith.select %29, %31, %20 : vector<1x512xi1>, vector<1x512xi32>
    %c16_i32_8 = arith.constant 16 : i32
    %33 = vector.broadcast %c16_i32_8 : i32 to vector<1x512xi32>
    %34 = arith.cmpi sge, %16, %33 : vector<1x512xi32>
    %35 = arith.extui %34 : vector<1x512xi1> to vector<1x512xi32>
    %36 = arith.sitofp %35 : vector<1x512xi32> to vector<1x512xf32>
    %c240_i32 = arith.constant 240 : i32
    %37 = vector.broadcast %c240_i32 : i32 to vector<1x512xi32>
    %38 = arith.cmpi slt, %16, %37 : vector<1x512xi32>
    %39 = arith.extui %38 : vector<1x512xi1> to vector<1x512xi32>
    %40 = arith.sitofp %39 : vector<1x512xi32> to vector<1x512xf32>
    %c1_i32_9 = arith.constant 1 : i32
    %41 = vector.broadcast %c1_i32_9 : i32 to vector<1x512xi32>
    %42 = arith.cmpi sge, %32, %41 : vector<1x512xi32>
    %43 = arith.extui %42 : vector<1x512xi1> to vector<1x512xi32>
    %44 = arith.sitofp %43 : vector<1x512xi32> to vector<1x512xf32>
    %c14_i32 = arith.constant 14 : i32
    %45 = vector.broadcast %c14_i32 : i32 to vector<1x512xi32>
    %46 = arith.cmpi sle, %32, %45 : vector<1x512xi32>
    %47 = arith.extui %46 : vector<1x512xi1> to vector<1x512xi32>
    %48 = arith.sitofp %47 : vector<1x512xi32> to vector<1x512xf32>
    %49 = arith.mulf %36, %44 : vector<1x512xf32>
    %50 = arith.mulf %36, %48 : vector<1x512xf32>
    %51 = arith.mulf %40, %44 : vector<1x512xf32>
    %52 = arith.mulf %40, %48 : vector<1x512xf32>
    %cst = arith.constant 1.000000e+00 : f32
    %53 = vector.broadcast %cst : f32 to vector<1x512xf32>
    %c0 = arith.constant 0 : index
    %c0_10 = arith.constant 0 : index
    %c0_11 = arith.constant 0 : index
    %54 = vector.load %arg1[%c0, %c0_10, %c0_11] : memref<1x6x256xf32, #tpu.memory_space<vmem>>, vector<1x6x256xf32>
    %55 = vector.shape_cast %54 : vector<1x6x256xf32> to vector<6x256xf32>
    %56 = vector.extract_strided_slice %55 {offsets = [0, 0], sizes = [3, 256], strides = [1, 1]} : vector<6x256xf32> to vector<3x256xf32>
    %57 = vector.extract_strided_slice %55 {offsets = [3, 0], sizes = [3, 256], strides = [1, 1]} : vector<6x256xf32> to vector<3x256xf32>
    %58 = tpu.concatenate %56, %57 in 1 : vector<3x256xf32>, vector<3x256xf32> -> vector<3x512xf32>
    %c16_i32_12 = arith.constant 16 : i32
    %59 = tpu.dynamic_rotate %58 by %c16_i32_12 dim 1 : vector<3x512xf32>, i32 -> vector<3x512xf32>
    %c496_i32 = arith.constant 496 : i32
    %60 = tpu.dynamic_rotate %58 by %c496_i32 dim 1 : vector<3x512xf32>, i32 -> vector<3x512xf32>
    %c1_i32_13 = arith.constant 1 : i32
    %61 = tpu.dynamic_rotate %59 by %c1_i32_13 dim 1 : vector<3x512xf32>, i32 -> vector<3x512xf32>
    %62 = vector.broadcast %49 : vector<1x512xf32> to vector<3x512xf32>
    %63 = arith.mulf %61, %62 : vector<3x512xf32>
    %64 = vector.broadcast %36 : vector<1x512xf32> to vector<3x512xf32>
    %65 = arith.mulf %59, %64 : vector<3x512xf32>
    %c511_i32 = arith.constant 511 : i32
    %66 = tpu.dynamic_rotate %59 by %c511_i32 dim 1 : vector<3x512xf32>, i32 -> vector<3x512xf32>
    %67 = vector.broadcast %50 : vector<1x512xf32> to vector<3x512xf32>
    %68 = arith.mulf %66, %67 : vector<3x512xf32>
    %c1_i32_14 = arith.constant 1 : i32
    %69 = tpu.dynamic_rotate %58 by %c1_i32_14 dim 1 : vector<3x512xf32>, i32 -> vector<3x512xf32>
    %70 = vector.broadcast %44 : vector<1x512xf32> to vector<3x512xf32>
    %71 = arith.mulf %69, %70 : vector<3x512xf32>
    %c511_i32_15 = arith.constant 511 : i32
    %72 = tpu.dynamic_rotate %58 by %c511_i32_15 dim 1 : vector<3x512xf32>, i32 -> vector<3x512xf32>
    %73 = vector.broadcast %48 : vector<1x512xf32> to vector<3x512xf32>
    %74 = arith.mulf %72, %73 : vector<3x512xf32>
    %c1_i32_16 = arith.constant 1 : i32
    %75 = tpu.dynamic_rotate %60 by %c1_i32_16 dim 1 : vector<3x512xf32>, i32 -> vector<3x512xf32>
    %76 = vector.broadcast %51 : vector<1x512xf32> to vector<3x512xf32>
    %77 = arith.mulf %75, %76 : vector<3x512xf32>
    %78 = vector.broadcast %40 : vector<1x512xf32> to vector<3x512xf32>
    %79 = arith.mulf %60, %78 : vector<3x512xf32>
    %c511_i32_17 = arith.constant 511 : i32
    %80 = tpu.dynamic_rotate %60 by %c511_i32_17 dim 1 : vector<3x512xf32>, i32 -> vector<3x512xf32>
    %81 = vector.broadcast %52 : vector<1x512xf32> to vector<3x512xf32>
    %82 = arith.mulf %80, %81 : vector<3x512xf32>
    %83 = tpu.concatenate %63, %65, %68, %71, %58, %74, %77, %79, %82, %53 in 0 : vector<3x512xf32>, vector<3x512xf32>, vector<3x512xf32>, vector<3x512xf32>, vector<3x512xf32>, vector<3x512xf32>, vector<3x512xf32>, vector<3x512xf32>, vector<3x512xf32>, vector<1x512xf32> -> vector<28x512xf32>
    %c0_18 = arith.constant 0 : index
    %c0_19 = arith.constant 0 : index
    %84 = vector.load %arg2[%c0_18, %c0_19] : memref<32x28xbf16, #tpu.memory_space<vmem>>, vector<32x28xbf16>
    %85 = arith.truncf %83 : vector<28x512xf32> to vector<28x512xbf16>
    %cst_20 = arith.constant dense<0.000000e+00> : vector<32x512xf32>
    %86 = tpu.matmul %84, %85, %cst_20 {dimension_numbers = #tpu.dot_dimension_numbers<[1], [0], [0], [1], [0, 0, 1, 1], [], []>} : vector<32x28xbf16>, vector<28x512xbf16>, vector<32x512xf32> -> vector<32x512xf32>
    %cst_21 = arith.constant 0.000000e+00 : f32
    %87 = vector.broadcast %cst_21 : f32 to vector<32x512xf32>
    %88 = arith.maximumf %86, %87 : vector<32x512xf32>
    %c16_i32_22 = arith.constant 16 : i32
    %89 = tpu.dynamic_rotate %88 by %c16_i32_22 dim 1 : vector<32x512xf32>, i32 -> vector<32x512xf32>
    %c496_i32_23 = arith.constant 496 : i32
    %90 = tpu.dynamic_rotate %88 by %c496_i32_23 dim 1 : vector<32x512xf32>, i32 -> vector<32x512xf32>
    %c1_i32_24 = arith.constant 1 : i32
    %91 = tpu.dynamic_rotate %89 by %c1_i32_24 dim 1 : vector<32x512xf32>, i32 -> vector<32x512xf32>
    %92 = vector.broadcast %49 : vector<1x512xf32> to vector<32x512xf32>
    %93 = arith.mulf %91, %92 : vector<32x512xf32>
    %94 = vector.broadcast %36 : vector<1x512xf32> to vector<32x512xf32>
    %95 = arith.mulf %89, %94 : vector<32x512xf32>
    %c511_i32_25 = arith.constant 511 : i32
    %96 = tpu.dynamic_rotate %89 by %c511_i32_25 dim 1 : vector<32x512xf32>, i32 -> vector<32x512xf32>
    %97 = vector.broadcast %50 : vector<1x512xf32> to vector<32x512xf32>
    %98 = arith.mulf %96, %97 : vector<32x512xf32>
    %c1_i32_26 = arith.constant 1 : i32
    %99 = tpu.dynamic_rotate %88 by %c1_i32_26 dim 1 : vector<32x512xf32>, i32 -> vector<32x512xf32>
    %100 = vector.broadcast %44 : vector<1x512xf32> to vector<32x512xf32>
    %101 = arith.mulf %99, %100 : vector<32x512xf32>
    %c511_i32_27 = arith.constant 511 : i32
    %102 = tpu.dynamic_rotate %88 by %c511_i32_27 dim 1 : vector<32x512xf32>, i32 -> vector<32x512xf32>
    %103 = vector.broadcast %48 : vector<1x512xf32> to vector<32x512xf32>
    %104 = arith.mulf %102, %103 : vector<32x512xf32>
    %c1_i32_28 = arith.constant 1 : i32
    %105 = tpu.dynamic_rotate %90 by %c1_i32_28 dim 1 : vector<32x512xf32>, i32 -> vector<32x512xf32>
    %106 = vector.broadcast %51 : vector<1x512xf32> to vector<32x512xf32>
    %107 = arith.mulf %105, %106 : vector<32x512xf32>
    %108 = vector.broadcast %40 : vector<1x512xf32> to vector<32x512xf32>
    %109 = arith.mulf %90, %108 : vector<32x512xf32>
    %c511_i32_29 = arith.constant 511 : i32
    %110 = tpu.dynamic_rotate %90 by %c511_i32_29 dim 1 : vector<32x512xf32>, i32 -> vector<32x512xf32>
    %111 = vector.broadcast %52 : vector<1x512xf32> to vector<32x512xf32>
    %112 = arith.mulf %110, %111 : vector<32x512xf32>
    %113 = tpu.concatenate %93, %95, %98, %101, %88, %104, %107, %109, %112, %53 in 0 : vector<32x512xf32>, vector<32x512xf32>, vector<32x512xf32>, vector<32x512xf32>, vector<32x512xf32>, vector<32x512xf32>, vector<32x512xf32>, vector<32x512xf32>, vector<32x512xf32>, vector<1x512xf32> -> vector<289x512xf32>
    %c0_30 = arith.constant 0 : index
    %c0_31 = arith.constant 0 : index
    %114 = vector.load %arg3[%c0_30, %c0_31] : memref<32x289xbf16, #tpu.memory_space<vmem>>, vector<32x289xbf16>
    %115 = arith.truncf %113 : vector<289x512xf32> to vector<289x512xbf16>
    %cst_32 = arith.constant dense<0.000000e+00> : vector<32x512xf32>
    %116 = tpu.matmul %114, %115, %cst_32 {dimension_numbers = #tpu.dot_dimension_numbers<[1], [0], [0], [1], [0, 0, 1, 1], [], []>} : vector<32x289xbf16>, vector<289x512xbf16>, vector<32x512xf32> -> vector<32x512xf32>
    %cst_33 = arith.constant 0.000000e+00 : f32
    %117 = vector.broadcast %cst_33 : f32 to vector<32x512xf32>
    %118 = arith.maximumf %116, %117 : vector<32x512xf32>
    %c16_i32_34 = arith.constant 16 : i32
    %119 = tpu.dynamic_rotate %118 by %c16_i32_34 dim 1 : vector<32x512xf32>, i32 -> vector<32x512xf32>
    %c496_i32_35 = arith.constant 496 : i32
    %120 = tpu.dynamic_rotate %118 by %c496_i32_35 dim 1 : vector<32x512xf32>, i32 -> vector<32x512xf32>
    %c1_i32_36 = arith.constant 1 : i32
    %121 = tpu.dynamic_rotate %119 by %c1_i32_36 dim 1 : vector<32x512xf32>, i32 -> vector<32x512xf32>
    %122 = vector.broadcast %49 : vector<1x512xf32> to vector<32x512xf32>
    %123 = arith.mulf %121, %122 : vector<32x512xf32>
    %124 = vector.broadcast %36 : vector<1x512xf32> to vector<32x512xf32>
    %125 = arith.mulf %119, %124 : vector<32x512xf32>
    %c511_i32_37 = arith.constant 511 : i32
    %126 = tpu.dynamic_rotate %119 by %c511_i32_37 dim 1 : vector<32x512xf32>, i32 -> vector<32x512xf32>
    %127 = vector.broadcast %50 : vector<1x512xf32> to vector<32x512xf32>
    %128 = arith.mulf %126, %127 : vector<32x512xf32>
    %c1_i32_38 = arith.constant 1 : i32
    %129 = tpu.dynamic_rotate %118 by %c1_i32_38 dim 1 : vector<32x512xf32>, i32 -> vector<32x512xf32>
    %130 = vector.broadcast %44 : vector<1x512xf32> to vector<32x512xf32>
    %131 = arith.mulf %129, %130 : vector<32x512xf32>
    %c511_i32_39 = arith.constant 511 : i32
    %132 = tpu.dynamic_rotate %118 by %c511_i32_39 dim 1 : vector<32x512xf32>, i32 -> vector<32x512xf32>
    %133 = vector.broadcast %48 : vector<1x512xf32> to vector<32x512xf32>
    %134 = arith.mulf %132, %133 : vector<32x512xf32>
    %c1_i32_40 = arith.constant 1 : i32
    %135 = tpu.dynamic_rotate %120 by %c1_i32_40 dim 1 : vector<32x512xf32>, i32 -> vector<32x512xf32>
    %136 = vector.broadcast %51 : vector<1x512xf32> to vector<32x512xf32>
    %137 = arith.mulf %135, %136 : vector<32x512xf32>
    %138 = vector.broadcast %40 : vector<1x512xf32> to vector<32x512xf32>
    %139 = arith.mulf %120, %138 : vector<32x512xf32>
    %c511_i32_41 = arith.constant 511 : i32
    %140 = tpu.dynamic_rotate %120 by %c511_i32_41 dim 1 : vector<32x512xf32>, i32 -> vector<32x512xf32>
    %141 = vector.broadcast %52 : vector<1x512xf32> to vector<32x512xf32>
    %142 = arith.mulf %140, %141 : vector<32x512xf32>
    %143 = tpu.concatenate %123, %125, %128, %131, %118, %134, %137, %139, %142, %53 in 0 : vector<32x512xf32>, vector<32x512xf32>, vector<32x512xf32>, vector<32x512xf32>, vector<32x512xf32>, vector<32x512xf32>, vector<32x512xf32>, vector<32x512xf32>, vector<32x512xf32>, vector<1x512xf32> -> vector<289x512xf32>
    %c0_42 = arith.constant 0 : index
    %c0_43 = arith.constant 0 : index
    %144 = vector.load %arg4[%c0_42, %c0_43] : memref<3x289xbf16, #tpu.memory_space<vmem>>, vector<3x289xbf16>
    %145 = arith.truncf %143 : vector<289x512xf32> to vector<289x512xbf16>
    %cst_44 = arith.constant dense<0.000000e+00> : vector<3x512xf32>
    %146 = tpu.matmul %144, %145, %cst_44 {dimension_numbers = #tpu.dot_dimension_numbers<[1], [0], [0], [1], [0, 0, 1, 1], [], []>} : vector<3x289xbf16>, vector<289x512xbf16>, vector<3x512xf32> -> vector<3x512xf32>
    %147 = math.tanh %146 : vector<3x512xf32>
    %c0_45 = arith.constant 0 : index
    %c0_46 = arith.constant 0 : index
    %148 = vector.load %arg5[%c0_45, %c0_46] : memref<3x3xf32, #tpu.memory_space<vmem>>, vector<3x1xf32>
    %c0_47 = arith.constant 0 : index
    %c1 = arith.constant 1 : index
    %149 = vector.load %arg5[%c0_47, %c1] : memref<3x3xf32, #tpu.memory_space<vmem>>, vector<3x1xf32>
    %c0_48 = arith.constant 0 : index
    %c2 = arith.constant 2 : index
    %150 = vector.load %arg5[%c0_48, %c2] : memref<3x3xf32, #tpu.memory_space<vmem>>, vector<3x1xf32>
    %151 = vector.broadcast %148 : vector<3x1xf32> to vector<3x512xf32>
    %152 = arith.mulf %58, %151 : vector<3x512xf32>
    %153 = vector.broadcast %149 : vector<3x1xf32> to vector<3x512xf32>
    %154 = arith.mulf %153, %147 : vector<3x512xf32>
    %155 = arith.addf %152, %154 : vector<3x512xf32>
    %156 = vector.broadcast %150 : vector<3x1xf32> to vector<3x512xf32>
    %157 = arith.addf %155, %156 : vector<3x512xf32>
    %cst_49 = arith.constant 0.000000e+00 : f32
    %cst_50 = arith.constant 1.000000e+00 : f32
    %158 = vector.broadcast %cst_49 : f32 to vector<3x512xf32>
    %159 = arith.maximumf %158, %157 : vector<3x512xf32>
    %160 = vector.broadcast %cst_50 : f32 to vector<3x512xf32>
    %161 = arith.minimumf %160, %159 : vector<3x512xf32>
    %162 = vector.extract_strided_slice %161 {offsets = [0, 0], sizes = [3, 256], strides = [1, 1]} : vector<3x512xf32> to vector<3x256xf32>
    %163 = vector.extract_strided_slice %161 {offsets = [0, 256], sizes = [3, 256], strides = [1, 1]} : vector<3x512xf32> to vector<3x256xf32>
    %164 = tpu.concatenate %162, %163 in 0 : vector<3x256xf32>, vector<3x256xf32> -> vector<6x256xf32>
    %c0_51 = arith.constant 0 : index
    %c0_52 = arith.constant 0 : index
    %c0_53 = arith.constant 0 : index
    %165 = vector.load %arg6[%c0_51, %c0_52, %c0_53] : memref<1x6x256xf32, #tpu.memory_space<vmem>>, vector<1x6x256xf32>
    %166 = vector.shape_cast %165 : vector<1x6x256xf32> to vector<6x256xf32>
    %167 = vector.shape_cast %164 : vector<6x256xf32> to vector<1x6x256xf32>
    tpu.vector_store %arg6[%c0_51, %c0_52, %c0_53], %167 {strides = array<i32>} : memref<1x6x256xf32, #tpu.memory_space<vmem>>, vector<1x6x256xf32>,
    return
  }
  func.func @transform_0(%arg0: i32) -> (i32, i32, i32) {
    %c0_i32 = arith.constant 0 : i32
    %c0_i32_0 = arith.constant 0 : i32
    %c0_i32_1 = arith.constant 0 : i32
    return %arg0, %c0_i32, %c0_i32_0 : i32, i32, i32
  }
  func.func @transform_1(%arg0: i32) -> (i32, i32) {
    %c0_i32 = arith.constant 0 : i32
    %c0_i32_0 = arith.constant 0 : i32
    %c0_i32_1 = arith.constant 0 : i32
    return %c0_i32, %c0_i32_0 : i32, i32
  }
  func.func @transform_2(%arg0: i32) -> (i32, i32) {
    %c0_i32 = arith.constant 0 : i32
    %c0_i32_0 = arith.constant 0 : i32
    %c0_i32_1 = arith.constant 0 : i32
    return %c0_i32, %c0_i32_0 : i32, i32
  }
  func.func @transform_3(%arg0: i32) -> (i32, i32) {
    %c0_i32 = arith.constant 0 : i32
    %c0_i32_0 = arith.constant 0 : i32
    %c0_i32_1 = arith.constant 0 : i32
    return %c0_i32, %c0_i32_0 : i32, i32
  }
  func.func @transform_4(%arg0: i32) -> (i32, i32) {
    %c0_i32 = arith.constant 0 : i32
    %c0_i32_0 = arith.constant 0 : i32
    %c0_i32_1 = arith.constant 0 : i32
    return %c0_i32, %c0_i32_0 : i32, i32
  }
  func.func @transform_5(%arg0: i32) -> (i32, i32, i32) {
    %c0_i32 = arith.constant 0 : i32
    %c0_i32_0 = arith.constant 0 : i32
    %c0_i32_1 = arith.constant 0 : i32
    return %arg0, %c0_i32, %c0_i32_0 : i32, i32, i32
  }
}

</mosaic_0001>

<llo_original>
// kernel: tpu_custom_call.1
$region0: #{tpu_custom_call.1}
  #allocation0 [shape = 'u32[]', space=smem, size = 0x4, offset = 0x4, fixed_abs, tag = 'smem constant byte address 0x4 - core index']
  #allocation1 [shape = 'u32[144,128]{1,0:T(1,128)}', space=vmem, size = 0x12000, scoped, tag = 'internal scratch']
  %s0 = inlined_call_operand.vmem [shape: f32[1,6,256], index: 0, kind: input, shape index: {}]
  %s1 = inlined_call_operand.vmem [shape: bf16[32,28], index: 1, kind: input, shape index: {}]
  %s2 = inlined_call_operand.hbm [shape: bf16[32,289], index: 2, kind: input, shape index: {}]
  %s3 = inlined_call_operand.vmem [shape: bf16[3,289], index: 3, kind: input, shape index: {}]
  %s4 = inlined_call_operand.vmem [shape: f32[3,3], index: 4, kind: input, shape index: {}]
  %s5 = inlined_call_operand.vmem [shape: f32[1,6,256], index: 5, kind: output, shape index: {}]
  %s6 = sld [smem:[#allocation0]]
  $region34: #{tpu_custom_call.1} parent=0
    _
  %s8 = ssub.s32 1, %s6
  %s9 = scalar_select 0, %s8, %s6
  $region1: #{tpu_custom_call.1} parent=0
    #allocation2 [shape = 'u8[24576]{0}', space=vmem, size = 0x6000, scoped, tag = 'input window, operand 2, single buffered']
    #allocation3 [shape = 's32[1]{0}', space=sflag, size = 0x4, scoped, tag = 'scoped memory for tpu_custom_call.1']
    %10 = vsyncpa [#allocation3], 0
    // Predicated region
    $region2: #{tpu_custom_call.1} parent=1 // pred_check
      _
    $region3: #{tpu_custom_call.1} parent=1 // pred_check_branch
      %12 = sbr.rel (0) target = $region5
    $region4: #{tpu_custom_call.1} parent=1 // pred_region
      _
    $region5: #{tpu_custom_call.1} parent=1 // pred_fallthru
      _
    // Predicated region
    $region6: #{tpu_custom_call.1} parent=1 // pred_check
      _
    $region7: #{tpu_custom_call.1} parent=1 // pred_check_branch
      %14 = sbr.rel (0) target = $region9
    $region8: #{tpu_custom_call.1} parent=1 // pred_region
      _
    $region9: #{tpu_custom_call.1} parent=1 // pred_fallthru
      _
    // Predicated region
    $region10: #{tpu_custom_call.1} parent=1 // pred_check
      _
    $region11: #{tpu_custom_call.1} parent=1 // pred_check_branch
      %16 = sbr.rel (0) target = $region13
    $region12: #{tpu_custom_call.1} parent=1 // pred_region
      %s18 = ssub.s32 768, 768
      %19 = vsyncadd [#allocation3], %s18
      %s20 = sshll.u32 [#allocation2], 4
      %s21 = int_to_ptr.vmem [resolvable:$true] %s20
      %26 = dma.hbm_to_vmem [thread:$0]  %s2, 768, %s21, [#allocation3], 192, 192, 12
    $region13: #{tpu_custom_call.1} parent=1 // pred_fallthru
      _
    // Predicated region
    $region14: #{tpu_custom_call.1} parent=1 // pred_check
      _
    $region15: #{tpu_custom_call.1} parent=1 // pred_check_branch
      %28 = sbr.rel (0) target = $region17
    $region16: #{tpu_custom_call.1} parent=1 // pred_region
      _
    $region17: #{tpu_custom_call.1} parent=1 // pred_fallthru
      _
    // Predicated region
    $region18: #{tpu_custom_call.1} parent=1 // pred_check
      _
    $region19: #{tpu_custom_call.1} parent=1 // pred_check_branch
      %30 = sbr.rel (0) target = $region21
    $region20: #{tpu_custom_call.1} parent=1 // pred_region
      _
    $region21: #{tpu_custom_call.1} parent=1 // pred_fallthru
      _
    // Predicated region
    $region22: #{tpu_custom_call.1} parent=1 // pred_check
      _
    $region23: #{tpu_custom_call.1} parent=1 // pred_check_branch
      %32 = sbr.rel (0) target = $region25
    $region24: #{tpu_custom_call.1} parent=1 // pred_region
      %33 = dma.done [#allocation3], 768
    $region25: #{tpu_custom_call.1} parent=1 // pred_fallthru
      _
    %v35 = vlaneseq
    %v36 = vand.u32 %v35, 127
    %v37 = vadd.s32 %v36, 128
    %v38 = vadd.s32 %v36, 256
    %v39 = vadd.s32 %v36, 384
    %vm40 = vcmp.lt.s32.totalorder %v36, 0
    %v41 = vsub.s32 0, %v36
    %v42 = vsel %vm40, %v41, %v36
    %v43 = vshrl.u32 %v42, 8
    %v44 = vand.u32 %v42, 255
    %v45 = vsub.s32 0, %v44
    %v46 = vsel %vm40, %v45, %v44
    %vm47 = vcmp.lt.s32.totalorder %v37, 0
    %v48 = vsub.s32 0, %v37
    %v49 = vsel %vm47, %v48, %v37
    %v50 = vshrl.u32 %v49, 8
    %v51 = vand.u32 %v49, 255
    %v52 = vsub.s32 0, %v51
    %v53 = vsel %vm47, %v52, %v51
    %vm54 = vcmp.lt.s32.totalorder %v38, 0
    %v55 = vsub.s32 0, %v38
    %v56 = vsel %vm54, %v55, %v38
    %v57 = vshrl.u32 %v56, 8
    %v58 = vand.u32 %v56, 255
    %v59 = vsub.s32 0, %v58
    %v60 = vsel %vm54, %v59, %v58
    %vm61 = vcmp.lt.s32.totalorder %v39, 0
    %v62 = vsub.s32 0, %v39
    %v63 = vsel %vm61, %v62, %v39
    %v64 = vshrl.u32 %v63, 8
    %v65 = vand.u32 %v63, 255
    %v66 = vsub.s32 0, %v65
    %v67 = vsel %vm61, %v66, %v65
    %vm68 = vcmp.ne.s32.totalorder %v46, 0
    %vm69 = vcmp.ne.s32.totalorder %v53, 0
    %vm70 = vcmp.ne.s32.totalorder %v60, 0
    %vm71 = vcmp.ne.s32.totalorder %v67, 0
    %vm72 = vcmp.lt.s32.totalorder %v46, 0
    %vm73 = vcmp.lt.s32.totalorder %v53, 0
    %vm74 = vcmp.lt.s32.totalorder %v60, 0
    %vm75 = vcmp.lt.s32.totalorder %v67, 0
    %vm76 = vmand %vm72, %vm68
    %vm77 = vmand %vm73, %vm69
    %vm78 = vmand %vm74, %vm70
    %vm79 = vmand %vm75, %vm71
    %v80 = vadd.s32 %v46, 256
    %v81 = vadd.s32 %v53, 256
    %v82 = vadd.s32 %v60, 256
    %v83 = vadd.s32 %v67, 256
    %v84 = vsel %vm76, %v80, %v46
    %v85 = vsel %vm77, %v81, %v53
    %v86 = vsel %vm78, %v82, %v60
    %v87 = vsel %vm79, %v83, %v67
    %vm88 = vcmp.lt.s32.totalorder %v84, 0
    %v89 = vsub.s32 0, %v84
    %v90 = vsel %vm88, %v89, %v84
    %v91 = vshrl.u32 %v90, 4
    %v92 = vand.u32 %v90, 15
    %v93 = vsub.s32 0, %v92
    %v94 = vsel %vm88, %v93, %v92
    %vm95 = vcmp.lt.s32.totalorder %v85, 0
    %v96 = vsub.s32 0, %v85
    %v97 = vsel %vm95, %v96, %v85
    %v98 = vshrl.u32 %v97, 4
    %v99 = vand.u32 %v97, 15
    %v100 = vsub.s32 0, %v99
    %v101 = vsel %vm95, %v100, %v99
    %vm102 = vcmp.lt.s32.totalorder %v86, 0
    %v103 = vsub.s32 0, %v86
    %v104 = vsel %vm102, %v103, %v86
    %v105 = vshrl.u32 %v104, 4
    %v106 = vand.u32 %v104, 15
    %v107 = vsub.s32 0, %v106
    %v108 = vsel %vm102, %v107, %v106
    %vm109 = vcmp.lt.s32.totalorder %v87, 0
    %v110 = vsub.s32 0, %v87
    %v111 = vsel %vm109, %v110, %v87
    %v112 = vshrl.u32 %v111, 4
    %v113 = vand.u32 %v111, 15
    %v114 = vsub.s32 0, %v113
    %v115 = vsel %vm109, %v114, %v113
    %vm116 = vcmp.ne.s32.totalorder %v94, 0
    %vm117 = vcmp.ne.s32.totalorder %v101, 0
    %vm118 = vcmp.ne.s32.totalorder %v108, 0
    %vm119 = vcmp.ne.s32.totalorder %v115, 0
    %vm120 = vcmp.lt.s32.totalorder %v94, 0
    %vm121 = vcmp.lt.s32.totalorder %v101, 0
    %vm122 = vcmp.lt.s32.totalorder %v108, 0
    %vm123 = vcmp.lt.s32.totalorder %v115, 0
    %vm124 = vmand %vm120, %vm116
    %vm125 = vmand %vm121, %vm117
    %vm126 = vmand %vm122, %vm118
    %vm127 = vmand %vm123, %vm119
    %v128 = vadd.s32 %v94, 16
    %v129 = vadd.s32 %v101, 16
    %v130 = vadd.s32 %v108, 16
    %v131 = vadd.s32 %v115, 16
    %v132 = vsel %vm124, %v128, %v94
    %v133 = vsel %vm125, %v129, %v101
    %v134 = vsel %vm126, %v130, %v108
    %v135 = vsel %vm127, %v131, %v115
    %vm136 = vcmp.ge.s32.totalorder %v84, 16
    %vm137 = vcmp.ge.s32.totalorder %v85, 16
    %vm138 = vcmp.ge.s32.totalorder %v86, 16
    %vm139 = vcmp.ge.s32.totalorder %v87, 16
    %v140 = vsel %vm136, 1, 0
    %v141 = vsel %vm137, 1, 0
    %v142 = vsel %vm138, 1, 0
    %v143 = vsel %vm139, 1, 0
    %v144 = vcvt.s32.f32 %v140
    %v145 = vcvt.s32.f32 %v141
    %v146 = vcvt.s32.f32 %v142
    %v147 = vcvt.s32.f32 %v143
    %vm148 = vcmp.lt.s32.totalorder %v84, 240
    %vm149 = vcmp.lt.s32.totalorder %v85, 240
    %vm150 = vcmp.lt.s32.totalorder %v86, 240
    %vm151 = vcmp.lt.s32.totalorder %v87, 240
    %v152 = vsel %vm148, 1, 0
    %v153 = vsel %vm149, 1, 0
    %v154 = vsel %vm150, 1, 0
    %v155 = vsel %vm151, 1, 0
    %v156 = vcvt.s32.f32 %v152
    %v157 = vcvt.s32.f32 %v153
    %v158 = vcvt.s32.f32 %v154
    %v159 = vcvt.s32.f32 %v155
    %vm160 = vcmp.ge.s32.totalorder %v132, 1
    %vm161 = vcmp.ge.s32.totalorder %v133, 1
    %vm162 = vcmp.ge.s32.totalorder %v134, 1
    %vm163 = vcmp.ge.s32.totalorder %v135, 1
    %v164 = vsel %vm160, 1, 0
    %v165 = vsel %vm161, 1, 0
    %v166 = vsel %vm162, 1, 0
    %v167 = vsel %vm163, 1, 0
    %v168 = vcvt.s32.f32 %v164
    %v169 = vcvt.s32.f32 %v165
    %v170 = vcvt.s32.f32 %v166
    %v171 = vcvt.s32.f32 %v167
    %vm172 = vcmp.le.s32.totalorder %v132, 14
    %vm173 = vcmp.le.s32.totalorder %v133, 14
    %vm174 = vcmp.le.s32.totalorder %v134, 14
    %vm175 = vcmp.le.s32.totalorder %v135, 14
    %v176 = vsel %vm172, 1, 0
    %v177 = vsel %vm173, 1, 0
    %v178 = vsel %vm174, 1, 0
    %v179 = vsel %vm175, 1, 0
    %v180 = vcvt.s32.f32 %v176
    %v181 = vcvt.s32.f32 %v177
    %v182 = vcvt.s32.f32 %v178
    %v183 = vcvt.s32.f32 %v179
    %v184 = vmul.f32 %v144, %v168
    %v185 = vmul.f32 %v145, %v169
    %v186 = vmul.f32 %v146, %v170
    %v187 = vmul.f32 %v147, %v171
    %v188 = vmul.f32 %v144, %v180
    %v189 = vmul.f32 %v145, %v181
    %v190 = vmul.f32 %v146, %v182
    %v191 = vmul.f32 %v147, %v183
    %v192 = vmul.f32 %v156, %v168
    %v193 = vmul.f32 %v157, %v169
    %v194 = vmul.f32 %v158, %v170
    %v195 = vmul.f32 %v159, %v171
    %v196 = vmul.f32 %v156, %v180
    %v197 = vmul.f32 %v157, %v181
    %v198 = vmul.f32 %v158, %v182
    %v199 = vmul.f32 %v159, %v183
    %v200 = vld [vmem:[%s0] sm:$0x3f]
    %v201 = vld [vmem:[%s0 + $0x8] sm:$0x3f]
    %v204 = vrot.slane %v200, 3
    %v205 = vrot.slane %v201, 3
    %208 = vrot.lane.b32.xlu0 %v200, 16
    %v209 = vpop.permute.xlu0 %208
    %210 = vrot.lane.b32.xlu0 %v201, 16
    %v211 = vpop.permute.xlu0 %210
    %212 = vrot.lane.b32.xlu0 %v204, 16
    %v213 = vpop.permute.xlu0 %212
    %214 = vrot.lane.b32.xlu0 %v205, 16
    %v215 = vpop.permute.xlu0 %214
    %vm216 = vcmp.lt.s32.totalorder %v36, 16
    %v217 = vsel %vm216, %v213, %v215
    %v218 = vsel %vm216, %v211, %v213
    %v219 = vsel %vm216, %v209, %v211
    %v220 = vsel %vm216, %v215, %v209
    %221 = vrot.lane.b32.xlu0 %v200, 112
    %v222 = vpop.permute.xlu0 %221
    %223 = vrot.lane.b32.xlu0 %v201, 112
    %v224 = vpop.permute.xlu0 %223
    %225 = vrot.lane.b32.xlu0 %v204, 112
    %v226 = vpop.permute.xlu0 %225
    %227 = vrot.lane.b32.xlu0 %v205, 112
    %v228 = vpop.permute.xlu0 %227
    %vm229 = vcmp.lt.s32.totalorder %v36, 112
    %v230 = vsel %vm229, %v226, %v228
    %v231 = vsel %vm229, %v224, %v226
    %v232 = vsel %vm229, %v222, %v224
    %v233 = vsel %vm229, %v228, %v222
    %234 = vrot.lane.b32.xlu0 %v220, 1
    %v235 = vpop.permute.xlu0 %234
    %236 = vrot.lane.b32.xlu0 %v219, 1
    %v237 = vpop.permute.xlu0 %236
    %238 = vrot.lane.b32.xlu0 %v218, 1
    %v239 = vpop.permute.xlu0 %238
    %240 = vrot.lane.b32.xlu0 %v217, 1
    %v241 = vpop.permute.xlu0 %240
    %vm242 = vcmp.lt.s32.totalorder %v36, 1
    %v243 = vsel %vm242, %v239, %v241
    %v244 = vsel %vm242, %v237, %v239
    %v245 = vsel %vm242, %v235, %v237
    %v246 = vsel %vm242, %v241, %v235
    %v247 = vmul.f32 %v246, %v184
    %v248 = vmul.f32 %v245, %v185
    %v249 = vmul.f32 %v244, %v186
    %v250 = vmul.f32 %v243, %v187
    %v251 = vmul.f32 %v220, %v144
    %v252 = vmul.f32 %v219, %v145
    %v253 = vmul.f32 %v218, %v146
    %v254 = vmul.f32 %v217, %v147
    %255 = vrot.lane.b32.xlu0 %v220, 127
    %v256 = vpop.permute.xlu0 %255
    %257 = vrot.lane.b32.xlu0 %v219, 127
    %v258 = vpop.permute.xlu0 %257
    %259 = vrot.lane.b32.xlu0 %v218, 127
    %v260 = vpop.permute.xlu0 %259
    %261 = vrot.lane.b32.xlu0 %v217, 127
    %v262 = vpop.permute.xlu0 %261
    %vm263 = vcmp.lt.s32.totalorder %v36, 127
    %v264 = vsel %vm263, %v260, %v262
    %v265 = vsel %vm263, %v258, %v260
    %v266 = vsel %vm263, %v256, %v258
    %v267 = vsel %vm263, %v262, %v256
    %v268 = vmul.f32 %v266, %v188
    %v269 = vmul.f32 %v265, %v189
    %v270 = vmul.f32 %v264, %v190
    %v271 = vmul.f32 %v267, %v191
    %272 = vrot.lane.b32.xlu0 %v200, 1
    %v273 = vpop.permute.xlu0 %272
    %274 = vrot.lane.b32.xlu0 %v201, 1
    %v275 = vpop.permute.xlu0 %274
    %276 = vrot.lane.b32.xlu0 %v204, 1
    %v277 = vpop.permute.xlu0 %276
    %278 = vrot.lane.b32.xlu0 %v205, 1
    %v279 = vpop.permute.xlu0 %278
    %v280 = vsel %vm242, %v277, %v279
    %v281 = vsel %vm242, %v275, %v277
    %v282 = vsel %vm242, %v273, %v275
    %v283 = vsel %vm242, %v279, %v273
    %v284 = vmul.f32 %v283, %v168
    %v285 = vmul.f32 %v282, %v169
    %v286 = vmul.f32 %v281, %v170
    %v287 = vmul.f32 %v280, %v171
    %288 = vrot.lane.b32.xlu0 %v200, 127
    %v289 = vpop.permute.xlu0 %288
    %290 = vrot.lane.b32.xlu0 %v201, 127
    %v291 = vpop.permute.xlu0 %290
    %292 = vrot.lane.b32.xlu0 %v204, 127
    %v293 = vpop.permute.xlu0 %292
    %294 = vrot.lane.b32.xlu0 %v205, 127
    %v295 = vpop.permute.xlu0 %294
    %v296 = vsel %vm263, %v293, %v295
    %v297 = vsel %vm263, %v291, %v293
    %v298 = vsel %vm263, %v289, %v291
    %v299 = vsel %vm263, %v295, %v289
    %v300 = vmul.f32 %v298, %v180
    %v301 = vmul.f32 %v297, %v181
    %v302 = vmul.f32 %v296, %v182
    %v303 = vmul.f32 %v299, %v183
    %304 = vrot.lane.b32.xlu0 %v232, 1
    %v305 = vpop.permute.xlu0 %304
    %306 = vrot.lane.b32.xlu0 %v231, 1
    %v307 = vpop.permute.xlu0 %306
    %308 = vrot.lane.b32.xlu0 %v230, 1
    %v309 = vpop.permute.xlu0 %308
    %310 = vrot.lane.b32.xlu0 %v233, 1
    %v311 = vpop.permute.xlu0 %310
    %v312 = vsel %vm242, %v309, %v311
    %v313 = vsel %vm242, %v307, %v309
    %v314 = vsel %vm242, %v305, %v307
    %v315 = vsel %vm242, %v311, %v305
    %v316 = vmul.f32 %v315, %v192
    %v317 = vmul.f32 %v314, %v193
    %v318 = vmul.f32 %v313, %v194
    %v319 = vmul.f32 %v312, %v195
    %v320 = vmul.f32 %v232, %v156
    %v321 = vmul.f32 %v231, %v157
    %v322 = vmul.f32 %v230, %v158
    %v323 = vmul.f32 %v233, %v159
    %324 = vrot.lane.b32.xlu0 %v232, 127
    %v325 = vpop.permute.xlu0 %324
    %326 = vrot.lane.b32.xlu0 %v231, 127
    %v327 = vpop.permute.xlu0 %326
    %328 = vrot.lane.b32.xlu0 %v230, 127
    %v329 = vpop.permute.xlu0 %328
    %330 = vrot.lane.b32.xlu0 %v233, 127
    %v331 = vpop.permute.xlu0 %330
    %v332 = vsel %vm263, %v329, %v331
    %v333 = vsel %vm263, %v327, %v329
    %v334 = vsel %vm263, %v325, %v327
    %v335 = vsel %vm263, %v331, %v325
    %v336 = vmul.f32 %v334, %v196
    %v337 = vmul.f32 %v333, %v197
    %v338 = vmul.f32 %v332, %v198
    %v339 = vmul.f32 %v335, %v199
    %v344 = vrot.slane %v251, 5
    %v345 = vrot.slane %v252, 5
    %v346 = vrot.slane %v253, 5
    %v347 = vrot.slane %v254, 5
    %v356 = vrot.slane %v268, 2
    %v357 = vrot.slane %v269, 2
    %v358 = vrot.slane %v270, 2
    %v359 = vrot.slane %v271, 2
    %v368 = vrot.slane %v284, 7
    %v369 = vrot.slane %v285, 7
    %v370 = vrot.slane %v286, 7
    %v371 = vrot.slane %v287, 7
    %v376 = vrot.slane %v200, 4
    %v377 = vrot.slane %v201, 4
    %v378 = vrot.slane %v204, 4
    %v379 = vrot.slane %v205, 4
    %v388 = vrot.slane %v300, 1
    %v389 = vrot.slane %v301, 1
    %v390 = vrot.slane %v302, 1
    %v391 = vrot.slane %v303, 1
    %v400 = vrot.slane %v316, 6
    %v401 = vrot.slane %v317, 6
    %v402 = vrot.slane %v318, 6
    %v403 = vrot.slane %v319, 6
    %v412 = vrot.slane %v320, 3
    %v413 = vrot.slane %v321, 3
    %v414 = vrot.slane %v322, 3
    %v415 = vrot.slane %v323, 3
    %vm420 = vcmask 1042432
    %v421 = vsel %vm420, %v247, %v344
    %v422 = vsel %vm420, %v248, %v345
    %v423 = vsel %vm420, %v249, %v346
    %v424 = vsel %vm420, %v250, %v347
    %vm425 = vcmask 1045504
    %v426 = vsel %vm425, %v421, %v356
    %v427 = vsel %vm425, %v422, %v357
    %v428 = vsel %vm425, %v423, %v358
    %v429 = vsel %vm425, %v424, %v359
    %vm430 = vcmask 1040384
    %v431 = vsel %vm430, %v356, %v368
    %v432 = vsel %vm430, %v357, %v369
    %v433 = vsel %vm430, %v358, %v370
    %v434 = vsel %vm430, %v359, %v371
    %vm435 = vcmask 1043456
    %v436 = vsel %vm435, %v431, %v376
    %v437 = vsel %vm435, %v432, %v377
    %v438 = vsel %vm435, %v433, %v378
    %v439 = vsel %vm435, %v434, %v379
    %vm440 = vcmask 1046528
    %v441 = vsel %vm440, %v436, %v388
    %v442 = vsel %vm440, %v437, %v389
    %v443 = vsel %vm440, %v438, %v390
    %v444 = vsel %vm440, %v439, %v391
    %vm445 = vcmask 1041408
    %v446 = vsel %vm445, %v388, %v400
    %v447 = vsel %vm445, %v389, %v401
    %v448 = vsel %vm445, %v390, %v402
    %v449 = vsel %vm445, %v391, %v403
    %vm450 = vcmask 1044480
    %v451 = vsel %vm450, %v446, %v412
    %v452 = vsel %vm450, %v447, %v413
    %v453 = vsel %vm450, %v448, %v414
    %v454 = vsel %vm450, %v449, %v415
    %v455 = vsel %vm420, %v336, 1.0
    %v456 = vsel %vm420, %v337, 1.0
    %v457 = vsel %vm420, %v338, 1.0
    %v458 = vsel %vm420, %v339, 1.0
    %v459 = vld [vmem:[%s1] sm:$0xf]
    %v460 = vld [vmem:[%s1 + $0x4] sm:$0xf]
    %v461 = vld [vmem:[%s1 + $0x8] sm:$0xf]
    %v462 = vld [vmem:[%s1 + $0xc] sm:$0xf]
    %v463 = vpack.c.bf16 %v441, %v426
    %v464 = vpack.c.bf16 %v442, %v427
    %v465 = vpack.c.bf16 %v443, %v428
    %v466 = vpack.c.bf16 %v444, %v429
    %v467 = vpack.c.bf16 %v455, %v451
    %v468 = vpack.c.bf16 %v456, %v452
    %v469 = vpack.c.bf16 %v457, %v453
    %v470 = vpack.c.bf16 %v458, %v454
    %v475 = vunpack.c.l.b16 %v459
    %v476 = vunpack.c.l.b16 %v460
    %v477 = vunpack.c.l.b16 %v461
    %v478 = vunpack.c.l.b16 %v462
    %v479 = vpack.c.b16 %v476, %v475
    %v480 = vpack.c.b16 %v478, %v477
    %vm481 = vcmask 228352
    %v483 = vsel %vm481, %v479, 0
    %v486 = vsel %vm481, %v480, 0
    %v489 = vsel %vm425, %v467, 0
    %v492 = vsel %vm425, %v468, 0
    %v495 = vsel %vm425, %v469, 0
    %v498 = vsel %vm425, %v470, 0
    %500 = vmatprep.subr.bf16.mxu0 %v464
    %501 = vmatpush1.bf16.msra.mxu0 %v463
    %502 = vmatprep.subr.bf16.mxu0 %v492
    %503 = vmatpush1.bf16.msra.mxu0 %v489
    %504 = vmatprep.subr.bf16.mxu0 0
    %505 = vmatpush1.bf16.msra.mxu0 0
    %506 = vmatprep.subr.bf16.mxu0 0
    %507 = vmatpush1.bf16.msra.mxu0 0
    %508 = vmatprep.subr.bf16.mxu0 0
    %509 = vmatpush1.bf16.msra.mxu0 0
    %510 = vmatprep.subr.bf16.mxu0 0
    %511 = vmatpush1.bf16.msra.mxu0 0
    %512 = vmatprep.subr.bf16.mxu0 0
    %513 = vmatpush1.bf16.msra.mxu0 0
    %514 = vmatprep.subr.bf16.mxu0 0
    %515 = vmatpush1.bf16.msra.mxu0 0
    %516 = vmatprep.subr.bf16.mxu0 0
    %517 = vmatpush1.bf16.msra.mxu0 0
    %518 = vmatprep.subr.bf16.mxu0 0
    %519 = vmatpush1.bf16.msra.mxu0 0
    %520 = vmatprep.subr.bf16.mxu0 0
    %521 = vmatpush1.bf16.msra.mxu0 0
    %522 = vmatprep.subr.bf16.mxu0 0
    %523 = vmatpush1.bf16.msra.mxu0 0
    %524 = vmatprep.subr.bf16.mxu0 0
    %525 = vmatpush1.bf16.msra.mxu0 0
    %526 = vmatprep.subr.bf16.mxu0 0
    %527 = vmatpush1.bf16.msra.mxu0 0
    %528 = vmatprep.subr.bf16.mxu0 0
    %529 = vmatpush1.bf16.msra.mxu0 0
    %530 = vmatprep.subr.bf16.mxu0 0
    %531 = vmatpush1.bf16.msra.mxu0 0
    %532 = vmatprep.mubr.bf16.mxu0 0
    %533 = vmatmul.mubr.bf16.gmra.mrb[0].mxu0 %v483
    %v534 = vpop.f32.mrb[0].mxu0
    %v535 = vadd.f32 0.0, %v534
    %v536 = vpop.f32.mrb[0].mxu0
    %v537 = vadd.f32 0.0, %v536
    %v538 = vpop.f32.mrb[0].mxu0
    %v539 = vadd.f32 0.0, %v538
    %v540 = vpop.f32.mrb[0].mxu0
    %v541 = vadd.f32 0.0, %v540
    %542 = vmatprep.mubr.bf16.mxu0 0
    %543 = vmatmul.mubr.bf16.gmra.mrb[0].mxu0 %v486
    %v544 = vpop.f32.mrb[0].mxu0
    %v545 = vadd.f32 0.0, %v544
    %v546 = vpop.f32.mrb[0].mxu0
    %v547 = vadd.f32 0.0, %v546
    %v548 = vpop.f32.mrb[0].mxu0
    %v549 = vadd.f32 0.0, %v548
    %v550 = vpop.f32.mrb[0].mxu0
    %v551 = vadd.f32 0.0, %v550
    %552 = vdwg.mxu0
    %553 = vmatprep.subr.bf16.mxu0 %v466
    %554 = vmatpush1.bf16.msra.mxu0 %v465
    %555 = vmatprep.subr.bf16.mxu0 %v498
    %556 = vmatpush1.bf16.msra.mxu0 %v495
    %557 = vmatprep.subr.bf16.mxu0 0
    %558 = vmatpush1.bf16.msra.mxu0 0
    %559 = vmatprep.subr.bf16.mxu0 0
    %560 = vmatpush1.bf16.msra.mxu0 0
    %561 = vmatprep.subr.bf16.mxu0 0
    %562 = vmatpush1.bf16.msra.mxu0 0
    %563 = vmatprep.subr.bf16.mxu0 0
    %564 = vmatpush1.bf16.msra.mxu0 0
    %565 = vmatprep.subr.bf16.mxu0 0
    %566 = vmatpush1.bf16.msra.mxu0 0
    %567 = vmatprep.subr.bf16.mxu0 0
    %568 = vmatpush1.bf16.msra.mxu0 0
    %569 = vmatprep.subr.bf16.mxu0 0
    %570 = vmatpush1.bf16.msra.mxu0 0
    %571 = vmatprep.subr.bf16.mxu0 0
    %572 = vmatpush1.bf16.msra.mxu0 0
    %573 = vmatprep.subr.bf16.mxu0 0
    %574 = vmatpush1.bf16.msra.mxu0 0
    %575 = vmatprep.subr.bf16.mxu0 0
    %576 = vmatpush1.bf16.msra.mxu0 0
    %577 = vmatprep.subr.bf16.mxu0 0
    %578 = vmatpush1.bf16.msra.mxu0 0
    %579 = vmatprep.subr.bf16.mxu0 0
    %580 = vmatpush1.bf16.msra.mxu0 0
    %581 = vmatprep.subr.bf16.mxu0 0
    %582 = vmatpush1.bf16.msra.mxu0 0
    %583 = vmatprep.subr.bf16.mxu0 0
    %584 = vmatpush1.bf16.msra.mxu0 0
    %585 = vmatprep.mubr.bf16.mxu0 0
    %586 = vmatmul.mubr.bf16.gmra.mrb[0].mxu0 %v483
    %v587 = vpop.f32.mrb[0].mxu0
    %v588 = vadd.f32 0.0, %v587
    %v589 = vpop.f32.mrb[0].mxu0
    %v590 = vadd.f32 0.0, %v589
    %v591 = vpop.f32.mrb[0].mxu0
    %v592 = vadd.f32 0.0, %v591
    %v593 = vpop.f32.mrb[0].mxu0
    %v594 = vadd.f32 0.0, %v593
    %595 = vmatprep.mubr.bf16.mxu0 0
    %596 = vmatmul.mubr.bf16.gmra.mrb[0].mxu0 %v486
    %v597 = vpop.f32.mrb[0].mxu0
    %v598 = vadd.f32 0.0, %v597
    %v599 = vpop.f32.mrb[0].mxu0
    %v600 = vadd.f32 0.0, %v599
    %v601 = vpop.f32.mrb[0].mxu0
    %v602 = vadd.f32 0.0, %v601
    %v603 = vpop.f32.mrb[0].mxu0
    %v604 = vadd.f32 0.0, %v603
    %605 = vdwg.mxu0
    %v606 = vmax.f32 %v535, 0.0
    %v607 = vmax.f32 %v537, 0.0
    %v608 = vmax.f32 %v588, 0.0
    %v609 = vmax.f32 %v590, 0.0
    %v610 = vmax.f32 %v539, 0.0
    %v611 = vmax.f32 %v541, 0.0
    %v612 = vmax.f32 %v592, 0.0
    %v613 = vmax.f32 %v594, 0.0
    %v614 = vmax.f32 %v545, 0.0
    %v615 = vmax.f32 %v547, 0.0
    %v616 = vmax.f32 %v598, 0.0
    %v617 = vmax.f32 %v600, 0.0
    %v618 = vmax.f32 %v549, 0.0
    %v619 = vmax.f32 %v551, 0.0
    %v620 = vmax.f32 %v602, 0.0
    %v621 = vmax.f32 %v604, 0.0
    %622 = vrot.lane.b32.xlu0 %v606, 16
    %v623 = vpop.permute.xlu0 %622
    %624 = vrot.lane.b32.xlu0 %v610, 16
    %v625 = vpop.permute.xlu0 %624
    %626 = vrot.lane.b32.xlu0 %v614, 16
    %v627 = vpop.permute.xlu0 %626
    %628 = vrot.lane.b32.xlu0 %v618, 16
    %v629 = vpop.permute.xlu0 %628
    %630 = vrot.lane.b32.xlu0 %v607, 16
    %v631 = vpop.permute.xlu0 %630
    %632 = vrot.lane.b32.xlu0 %v611, 16
    %v633 = vpop.permute.xlu0 %632
    %634 = vrot.lane.b32.xlu0 %v615, 16
    %v635 = vpop.permute.xlu0 %634
    %636 = vrot.lane.b32.xlu0 %v619, 16
    %v637 = vpop.permute.xlu0 %636
    %638 = vrot.lane.b32.xlu0 %v608, 16
    %v639 = vpop.permute.xlu0 %638
    %640 = vrot.lane.b32.xlu0 %v612, 16
    %v641 = vpop.permute.xlu0 %640
    %642 = vrot.lane.b32.xlu0 %v616, 16
    %v643 = vpop.permute.xlu0 %642
    %644 = vrot.lane.b32.xlu0 %v620, 16
    %v645 = vpop.permute.xlu0 %644
    %646 = vrot.lane.b32.xlu0 %v609, 16
    %v647 = vpop.permute.xlu0 %646
    %648 = vrot.lane.b32.xlu0 %v613, 16
    %v649 = vpop.permute.xlu0 %648
    %650 = vrot.lane.b32.xlu0 %v617, 16
    %v651 = vpop.permute.xlu0 %650
    %652 = vrot.lane.b32.xlu0 %v621, 16
    %v653 = vpop.permute.xlu0 %652
    %v654 = vsel %vm216, %v639, %v647
    %v655 = vsel %vm216, %v641, %v649
    %v656 = vsel %vm216, %v643, %v651
    %v657 = vsel %vm216, %v645, %v653
    %v658 = vsel %vm216, %v631, %v639
    %v659 = vsel %vm216, %v633, %v641
    %v660 = vsel %vm216, %v635, %v643
    %v661 = vsel %vm216, %v637, %v645
    %v662 = vsel %vm216, %v623, %v631
    %v663 = vsel %vm216, %v625, %v633
    %v664 = vsel %vm216, %v627, %v635
    %v665 = vsel %vm216, %v629, %v637
    %v666 = vsel %vm216, %v647, %v623
    %v667 = vsel %vm216, %v649, %v625
    %v668 = vsel %vm216, %v651, %v627
    %v669 = vsel %vm216, %v653, %v629
    %670 = vrot.lane.b32.xlu0 %v606, 112
    %v671 = vpop.permute.xlu0 %670
    %672 = vrot.lane.b32.xlu0 %v610, 112
    %v673 = vpop.permute.xlu0 %672
    %674 = vrot.lane.b32.xlu0 %v614, 112
    %v675 = vpop.permute.xlu0 %674
    %676 = vrot.lane.b32.xlu0 %v618, 112
    %v677 = vpop.permute.xlu0 %676
    %678 = vrot.lane.b32.xlu0 %v607, 112
    %v679 = vpop.permute.xlu0 %678
    %680 = vrot.lane.b32.xlu0 %v611, 112
    %v681 = vpop.permute.xlu0 %680
    %682 = vrot.lane.b32.xlu0 %v615, 112
    %v683 = vpop.permute.xlu0 %682
    %684 = vrot.lane.b32.xlu0 %v619, 112
    %v685 = vpop.permute.xlu0 %684
    %686 = vrot.lane.b32.xlu0 %v608, 112
    %v687 = vpop.permute.xlu0 %686
    %688 = vrot.lane.b32.xlu0 %v612, 112
    %v689 = vpop.permute.xlu0 %688
    %690 = vrot.lane.b32.xlu0 %v616, 112
    %v691 = vpop.permute.xlu0 %690
    %692 = vrot.lane.b32.xlu0 %v620, 112
    %v693 = vpop.permute.xlu0 %692
    %694 = vrot.lane.b32.xlu0 %v609, 112
    %v695 = vpop.permute.xlu0 %694
    %696 = vrot.lane.b32.xlu0 %v613, 112
    %v697 = vpop.permute.xlu0 %696
    %698 = vrot.lane.b32.xlu0 %v617, 112
    %v699 = vpop.permute.xlu0 %698
    %700 = vrot.lane.b32.xlu0 %v621, 112
    %v701 = vpop.permute.xlu0 %700
    %v702 = vsel %vm229, %v687, %v695
    %v703 = vsel %vm229, %v689, %v697
    %v704 = vsel %vm229, %v691, %v699
    %v705 = vsel %vm229, %v693, %v701
    %v706 = vsel %vm229, %v679, %v687
    %v707 = vsel %vm229, %v681, %v689
    %v708 = vsel %vm229, %v683, %v691
    %v709 = vsel %vm229, %v685, %v693
    %v710 = vsel %vm229, %v671, %v679
    %v711 = vsel %vm229, %v673, %v681
    %v712 = vsel %vm229, %v675, %v683
    %v713 = vsel %vm229, %v677, %v685
    %v714 = vsel %vm229, %v695, %v671
    %v715 = vsel %vm229, %v697, %v673
    %v716 = vsel %vm229, %v699, %v675
    %v717 = vsel %vm229, %v701, %v677
    %718 = vrot.lane.b32.xlu0 %v666, 1
    %v719 = vpop.permute.xlu0 %718
    %720 = vrot.lane.b32.xlu0 %v667, 1
    %v721 = vpop.permute.xlu0 %720
    %722 = vrot.lane.b32.xlu0 %v668, 1
    %v723 = vpop.permute.xlu0 %722
    %724 = vrot.lane.b32.xlu0 %v669, 1
    %v725 = vpop.permute.xlu0 %724
    %726 = vrot.lane.b32.xlu0 %v662, 1
    %v727 = vpop.permute.xlu0 %726
    %728 = vrot.lane.b32.xlu0 %v663, 1
    %v729 = vpop.permute.xlu0 %728
    %730 = vrot.lane.b32.xlu0 %v664, 1
    %v731 = vpop.permute.xlu0 %730
    %732 = vrot.lane.b32.xlu0 %v665, 1
    %v733 = vpop.permute.xlu0 %732
    %734 = vrot.lane.b32.xlu0 %v658, 1
    %v735 = vpop.permute.xlu0 %734
    %736 = vrot.lane.b32.xlu0 %v659, 1
    %v737 = vpop.permute.xlu0 %736
    %738 = vrot.lane.b32.xlu0 %v660, 1
    %v739 = vpop.permute.xlu0 %738
    %740 = vrot.lane.b32.xlu0 %v661, 1
    %v741 = vpop.permute.xlu0 %740
    %742 = vrot.lane.b32.xlu0 %v654, 1
    %v743 = vpop.permute.xlu0 %742
    %744 = vrot.lane.b32.xlu0 %v655, 1
    %v745 = vpop.permute.xlu0 %744
    %746 = vrot.lane.b32.xlu0 %v656, 1
    %v747 = vpop.permute.xlu0 %746
    %748 = vrot.lane.b32.xlu0 %v657, 1
    %v749 = vpop.permute.xlu0 %748
    %v750 = vsel %vm242, %v735, %v743
    %v751 = vsel %vm242, %v737, %v745
    %v752 = vsel %vm242, %v739, %v747
    %v753 = vsel %vm242, %v741, %v749
    %v754 = vsel %vm242, %v727, %v735
    %v755 = vsel %vm242, %v729, %v737
    %v756 = vsel %vm242, %v731, %v739
    %v757 = vsel %vm242, %v733, %v741
    %v758 = vsel %vm242, %v719, %v727
    %v759 = vsel %vm242, %v721, %v729
    %v760 = vsel %vm242, %v723, %v731
    %v761 = vsel %vm242, %v725, %v733
    %v762 = vsel %vm242, %v743, %v719
    %v763 = vsel %vm242, %v745, %v721
    %v764 = vsel %vm242, %v747, %v723
    %v765 = vsel %vm242, %v749, %v725
    %v766 = vmul.f32 %v762, %v184
    %v767 = vmul.f32 %v758, %v185
    %v768 = vmul.f32 %v754, %v186
    %v769 = vmul.f32 %v750, %v187
    %v770 = vmul.f32 %v763, %v184
    %v771 = vmul.f32 %v759, %v185
    %v772 = vmul.f32 %v755, %v186
    %v773 = vmul.f32 %v751, %v187
    %v774 = vmul.f32 %v764, %v184
    %v775 = vmul.f32 %v760, %v185
    %v776 = vmul.f32 %v756, %v186
    %v777 = vmul.f32 %v752, %v187
    %v778 = vmul.f32 %v765, %v184
    %v779 = vmul.f32 %v761, %v185
    %v780 = vmul.f32 %v757, %v186
    %v781 = vmul.f32 %v753, %v187
    %v782 = vmul.f32 %v666, %v144
    %v783 = vmul.f32 %v662, %v145
    %v784 = vmul.f32 %v658, %v146
    %v785 = vmul.f32 %v654, %v147
    %v786 = vmul.f32 %v667, %v144
    %v787 = vmul.f32 %v663, %v145
    %v788 = vmul.f32 %v659, %v146
    %v789 = vmul.f32 %v655, %v147
    %v790 = vmul.f32 %v668, %v144
    %v791 = vmul.f32 %v664, %v145
    %v792 = vmul.f32 %v660, %v146
    %v793 = vmul.f32 %v656, %v147
    %v794 = vmul.f32 %v669, %v144
    %v795 = vmul.f32 %v665, %v145
    %v796 = vmul.f32 %v661, %v146
    %v797 = vmul.f32 %v657, %v147
    %798 = vrot.lane.b32.xlu0 %v666, 127
    %v799 = vpop.permute.xlu0 %798
    %800 = vrot.lane.b32.xlu0 %v667, 127
    %v801 = vpop.permute.xlu0 %800
    %802 = vrot.lane.b32.xlu0 %v668, 127
    %v803 = vpop.permute.xlu0 %802
    %804 = vrot.lane.b32.xlu0 %v669, 127
    %v805 = vpop.permute.xlu0 %804
    %806 = vrot.lane.b32.xlu0 %v662, 127
    %v807 = vpop.permute.xlu0 %806
    %808 = vrot.lane.b32.xlu0 %v663, 127
    %v809 = vpop.permute.xlu0 %808
    %810 = vrot.lane.b32.xlu0 %v664, 127
    %v811 = vpop.permute.xlu0 %810
    %812 = vrot.lane.b32.xlu0 %v665, 127
    %v813 = vpop.permute.xlu0 %812
    %814 = vrot.lane.b32.xlu0 %v658, 127
    %v815 = vpop.permute.xlu0 %814
    %816 = vrot.lane.b32.xlu0 %v659, 127
    %v817 = vpop.permute.xlu0 %816
    %818 = vrot.lane.b32.xlu0 %v660, 127
    %v819 = vpop.permute.xlu0 %818
    %820 = vrot.lane.b32.xlu0 %v661, 127
    %v821 = vpop.permute.xlu0 %820
    %822 = vrot.lane.b32.xlu0 %v654, 127
    %v823 = vpop.permute.xlu0 %822
    %824 = vrot.lane.b32.xlu0 %v655, 127
    %v825 = vpop.permute.xlu0 %824
    %826 = vrot.lane.b32.xlu0 %v656, 127
    %v827 = vpop.permute.xlu0 %826
    %828 = vrot.lane.b32.xlu0 %v657, 127
    %v829 = vpop.permute.xlu0 %828
    %v830 = vsel %vm263, %v815, %v823
    %v831 = vsel %vm263, %v817, %v825
    %v832 = vsel %vm263, %v819, %v827
    %v833 = vsel %vm263, %v821, %v829
    %v834 = vsel %vm263, %v807, %v815
    %v835 = vsel %vm263, %v809, %v817
    %v836 = vsel %vm263, %v811, %v819
    %v837 = vsel %vm263, %v813, %v821
    %v838 = vsel %vm263, %v799, %v807
    %v839 = vsel %vm263, %v801, %v809
    %v840 = vsel %vm263, %v803, %v811
    %v841 = vsel %vm263, %v805, %v813
    %v842 = vsel %vm263, %v823, %v799
    %v843 = vsel %vm263, %v825, %v801
    %v844 = vsel %vm263, %v827, %v803
    %v845 = vsel %vm263, %v829, %v805
    %v846 = vmul.f32 %v838, %v188
    %v847 = vmul.f32 %v834, %v189
    %v848 = vmul.f32 %v830, %v190
    %v849 = vmul.f32 %v842, %v191
    %v850 = vmul.f32 %v839, %v188
    %v851 = vmul.f32 %v835, %v189
    %v852 = vmul.f32 %v831, %v190
    %v853 = vmul.f32 %v843, %v191
    %v854 = vmul.f32 %v840, %v188
    %v855 = vmul.f32 %v836, %v189
    %v856 = vmul.f32 %v832, %v190
    %v857 = vmul.f32 %v844, %v191
    %v858 = vmul.f32 %v841, %v188
    %v859 = vmul.f32 %v837, %v189
    %v860 = vmul.f32 %v833, %v190
    %v861 = vmul.f32 %v845, %v191
    %862 = vrot.lane.b32.xlu0 %v606, 1
    %v863 = vpop.permute.xlu0 %862
    %864 = vrot.lane.b32.xlu0 %v610, 1
    %v865 = vpop.permute.xlu0 %864
    %866 = vrot.lane.b32.xlu0 %v614, 1
    %v867 = vpop.permute.xlu0 %866
    %868 = vrot.lane.b32.xlu0 %v618, 1
    %v869 = vpop.permute.xlu0 %868
    %870 = vrot.lane.b32.xlu0 %v607, 1
    %v871 = vpop.permute.xlu0 %870
    %872 = vrot.lane.b32.xlu0 %v611, 1
    %v873 = vpop.permute.xlu0 %872
    %874 = vrot.lane.b32.xlu0 %v615, 1
    %v875 = vpop.permute.xlu0 %874
    %876 = vrot.lane.b32.xlu0 %v619, 1
    %v877 = vpop.permute.xlu0 %876
    %878 = vrot.lane.b32.xlu0 %v608, 1
    %v879 = vpop.permute.xlu0 %878
    %880 = vrot.lane.b32.xlu0 %v612, 1
    %v881 = vpop.permute.xlu0 %880
    %882 = vrot.lane.b32.xlu0 %v616, 1
    %v883 = vpop.permute.xlu0 %882
    %884 = vrot.lane.b32.xlu0 %v620, 1
    %v885 = vpop.permute.xlu0 %884
    %886 = vrot.lane.b32.xlu0 %v609, 1
    %v887 = vpop.permute.xlu0 %886
    %888 = vrot.lane.b32.xlu0 %v613, 1
    %v889 = vpop.permute.xlu0 %888
    %890 = vrot.lane.b32.xlu0 %v617, 1
    %v891 = vpop.permute.xlu0 %890
    %892 = vrot.lane.b32.xlu0 %v621, 1
    %v893 = vpop.permute.xlu0 %892
    %v894 = vsel %vm242, %v879, %v887
    %v895 = vsel %vm242, %v881, %v889
    %v896 = vsel %vm242, %v883, %v891
    %v897 = vsel %vm242, %v885, %v893
    %v898 = vsel %vm242, %v871, %v879
    %v899 = vsel %vm242, %v873, %v881
    %v900 = vsel %vm242, %v875, %v883
    %v901 = vsel %vm242, %v877, %v885
    %v902 = vsel %vm242, %v863, %v871
    %v903 = vsel %vm242, %v865, %v873
    %v904 = vsel %vm242, %v867, %v875
    %v905 = vsel %vm242, %v869, %v877
    %v906 = vsel %vm242, %v887, %v863
    %v907 = vsel %vm242, %v889, %v865
    %v908 = vsel %vm242, %v891, %v867
    %v909 = vsel %vm242, %v893, %v869
    %v910 = vmul.f32 %v906, %v168
    %v911 = vmul.f32 %v902, %v169
    %v912 = vmul.f32 %v898, %v170
    %v913 = vmul.f32 %v894, %v171
    %v914 = vmul.f32 %v907, %v168
    %v915 = vmul.f32 %v903, %v169
    %v916 = vmul.f32 %v899, %v170
    %v917 = vmul.f32 %v895, %v171
    %v918 = vmul.f32 %v908, %v168
    %v919 = vmul.f32 %v904, %v169
    %v920 = vmul.f32 %v900, %v170
    %v921 = vmul.f32 %v896, %v171
    %v922 = vmul.f32 %v909, %v168
    %v923 = vmul.f32 %v905, %v169
    %v924 = vmul.f32 %v901, %v170
    %v925 = vmul.f32 %v897, %v171
    %926 = vrot.lane.b32.xlu0 %v606, 127
    %v927 = vpop.permute.xlu0 %926
    %928 = vrot.lane.b32.xlu0 %v610, 127
    %v929 = vpop.permute.xlu0 %928
    %930 = vrot.lane.b32.xlu0 %v614, 127
    %v931 = vpop.permute.xlu0 %930
    %932 = vrot.lane.b32.xlu0 %v618, 127
    %v933 = vpop.permute.xlu0 %932
    %934 = vrot.lane.b32.xlu0 %v607, 127
    %v935 = vpop.permute.xlu0 %934
    %936 = vrot.lane.b32.xlu0 %v611, 127
    %v937 = vpop.permute.xlu0 %936
    %938 = vrot.lane.b32.xlu0 %v615, 127
    %v939 = vpop.permute.xlu0 %938
    %940 = vrot.lane.b32.xlu0 %v619, 127
    %v941 = vpop.permute.xlu0 %940
    %942 = vrot.lane.b32.xlu0 %v608, 127
    %v943 = vpop.permute.xlu0 %942
    %944 = vrot.lane.b32.xlu0 %v612, 127
    %v945 = vpop.permute.xlu0 %944
    %946 = vrot.lane.b32.xlu0 %v616, 127
    %v947 = vpop.permute.xlu0 %946
    %948 = vrot.lane.b32.xlu0 %v620, 127
    %v949 = vpop.permute.xlu0 %948
    %950 = vrot.lane.b32.xlu0 %v609, 127
    %v951 = vpop.permute.xlu0 %950
    %952 = vrot.lane.b32.xlu0 %v613, 127
    %v953 = vpop.permute.xlu0 %952
    %954 = vrot.lane.b32.xlu0 %v617, 127
    %v955 = vpop.permute.xlu0 %954
    %956 = vrot.lane.b32.xlu0 %v621, 127
    %v957 = vpop.permute.xlu0 %956
    %v958 = vsel %vm263, %v943, %v951
    %v959 = vsel %vm263, %v945, %v953
    %v960 = vsel %vm263, %v947, %v955
    %v961 = vsel %vm263, %v949, %v957
    %v962 = vsel %vm263, %v935, %v943
    %v963 = vsel %vm263, %v937, %v945
    %v964 = vsel %vm263, %v939, %v947
    %v965 = vsel %vm263, %v941, %v949
    %v966 = vsel %vm263, %v927, %v935
    %v967 = vsel %vm263, %v929, %v937
    %v968 = vsel %vm263, %v931, %v939
    %v969 = vsel %vm263, %v933, %v941
    %v970 = vsel %vm263, %v951, %v927
    %v971 = vsel %vm263, %v953, %v929
    %v972 = vsel %vm263, %v955, %v931
    %v973 = vsel %vm263, %v957, %v933
    %v974 = vmul.f32 %v966, %v180
    %v975 = vmul.f32 %v962, %v181
    %v976 = vmul.f32 %v958, %v182
    %v977 = vmul.f32 %v970, %v183
    %v978 = vmul.f32 %v967, %v180
    %v979 = vmul.f32 %v963, %v181
    %v980 = vmul.f32 %v959, %v182
    %v981 = vmul.f32 %v971, %v183
    %v982 = vmul.f32 %v968, %v180
    %v983 = vmul.f32 %v964, %v181
    %v984 = vmul.f32 %v960, %v182
    %v985 = vmul.f32 %v972, %v183
    %v986 = vmul.f32 %v969, %v180
    %v987 = vmul.f32 %v965, %v181
    %v988 = vmul.f32 %v961, %v182
    %v989 = vmul.f32 %v973, %v183
    %990 = vrot.lane.b32.xlu0 %v710, 1
    %v991 = vpop.permute.xlu0 %990
    %992 = vrot.lane.b32.xlu0 %v711, 1
    %v993 = vpop.permute.xlu0 %992
    %994 = vrot.lane.b32.xlu0 %v712, 1
    %v995 = vpop.permute.xlu0 %994
    %996 = vrot.lane.b32.xlu0 %v713, 1
    %v997 = vpop.permute.xlu0 %996
    %998 = vrot.lane.b32.xlu0 %v706, 1
    %v999 = vpop.permute.xlu0 %998
    %1000 = vrot.lane.b32.xlu0 %v707, 1
    %v1001 = vpop.permute.xlu0 %1000
    %1002 = vrot.lane.b32.xlu0 %v708, 1
    %v1003 = vpop.permute.xlu0 %1002
    %1004 = vrot.lane.b32.xlu0 %v709, 1
    %v1005 = vpop.permute.xlu0 %1004
    %1006 = vrot.lane.b32.xlu0 %v702, 1
    %v1007 = vpop.permute.xlu0 %1006
    %1008 = vrot.lane.b32.xlu0 %v703, 1
    %v1009 = vpop.permute.xlu0 %1008
    %1010 = vrot.lane.b32.xlu0 %v704, 1
    %v1011 = vpop.permute.xlu0 %1010
    %1012 = vrot.lane.b32.xlu0 %v705, 1
    %v1013 = vpop.permute.xlu0 %1012
    %1014 = vrot.lane.b32.xlu0 %v714, 1
    %v1015 = vpop.permute.xlu0 %1014
    %1016 = vrot.lane.b32.xlu0 %v715, 1
    %v1017 = vpop.permute.xlu0 %1016
    %1018 = vrot.lane.b32.xlu0 %v716, 1
    %v1019 = vpop.permute.xlu0 %1018
    %1020 = vrot.lane.b32.xlu0 %v717, 1
    %v1021 = vpop.permute.xlu0 %1020
    %v1022 = vsel %vm242, %v1007, %v1015
    %v1023 = vsel %vm242, %v1009, %v1017
    %v1024 = vsel %vm242, %v1011, %v1019
    %v1025 = vsel %vm242, %v1013, %v1021
    %v1026 = vsel %vm242, %v999, %v1007
    %v1027 = vsel %vm242, %v1001, %v1009
    %v1028 = vsel %vm242, %v1003, %v1011
    %v1029 = vsel %vm242, %v1005, %v1013
    %v1030 = vsel %vm242, %v991, %v999
    %v1031 = vsel %vm242, %v993, %v1001
    %v1032 = vsel %vm242, %v995, %v1003
    %v1033 = vsel %vm242, %v997, %v1005
    %v1034 = vsel %vm242, %v1015, %v991
    %v1035 = vsel %vm242, %v1017, %v993
    %v1036 = vsel %vm242, %v1019, %v995
    %v1037 = vsel %vm242, %v1021, %v997
    %v1038 = vmul.f32 %v1034, %v192
    %v1039 = vmul.f32 %v1030, %v193
    %v1040 = vmul.f32 %v1026, %v194
    %v1041 = vmul.f32 %v1022, %v195
    %v1042 = vmul.f32 %v1035, %v192
    %v1043 = vmul.f32 %v1031, %v193
    %v1044 = vmul.f32 %v1027, %v194
    %v1045 = vmul.f32 %v1023, %v195
    %v1046 = vmul.f32 %v1036, %v192
    %v1047 = vmul.f32 %v1032, %v193
    %v1048 = vmul.f32 %v1028, %v194
    %v1049 = vmul.f32 %v1024, %v195
    %v1050 = vmul.f32 %v1037, %v192
    %v1051 = vmul.f32 %v1033, %v193
    %v1052 = vmul.f32 %v1029, %v194
    %v1053 = vmul.f32 %v1025, %v195
    %v1054 = vmul.f32 %v710, %v156
    %v1055 = vmul.f32 %v706, %v157
    %v1056 = vmul.f32 %v702, %v158
    %v1057 = vmul.f32 %v714, %v159
    %v1058 = vmul.f32 %v711, %v156
    %v1059 = vmul.f32 %v707, %v157
    %v1060 = vmul.f32 %v703, %v158
    %v1061 = vmul.f32 %v715, %v159
    %v1062 = vmul.f32 %v712, %v156
    %v1063 = vmul.f32 %v708, %v157
    %v1064 = vmul.f32 %v704, %v158
    %v1065 = vmul.f32 %v716, %v159
    %v1066 = vmul.f32 %v713, %v156
    %v1067 = vmul.f32 %v709, %v157
    %v1068 = vmul.f32 %v705, %v158
    %v1069 = vmul.f32 %v717, %v159
    %1070 = vrot.lane.b32.xlu0 %v710, 127
    %v1071 = vpop.permute.xlu0 %1070
    %1072 = vrot.lane.b32.xlu0 %v711, 127
    %v1073 = vpop.permute.xlu0 %1072
    %1074 = vrot.lane.b32.xlu0 %v712, 127
    %v1075 = vpop.permute.xlu0 %1074
    %1076 = vrot.lane.b32.xlu0 %v713, 127
    %v1077 = vpop.permute.xlu0 %1076
    %1078 = vrot.lane.b32.xlu0 %v706, 127
    %v1079 = vpop.permute.xlu0 %1078
    %1080 = vrot.lane.b32.xlu0 %v707, 127
    %v1081 = vpop.permute.xlu0 %1080
    %1082 = vrot.lane.b32.xlu0 %v708, 127
    %v1083 = vpop.permute.xlu0 %1082
    %1084 = vrot.lane.b32.xlu0 %v709, 127
    %v1085 = vpop.permute.xlu0 %1084
    %1086 = vrot.lane.b32.xlu0 %v702, 127
    %v1087 = vpop.permute.xlu0 %1086
    %1088 = vrot.lane.b32.xlu0 %v703, 127
    %v1089 = vpop.permute.xlu0 %1088
    %1090 = vrot.lane.b32.xlu0 %v704, 127
    %v1091 = vpop.permute.xlu0 %1090
    %1092 = vrot.lane.b32.xlu0 %v705, 127
    %v1093 = vpop.permute.xlu0 %1092
    %1094 = vrot.lane.b32.xlu0 %v714, 127
    %v1095 = vpop.permute.xlu0 %1094
    %1096 = vrot.lane.b32.xlu0 %v715, 127
    %v1097 = vpop.permute.xlu0 %1096
    %1098 = vrot.lane.b32.xlu0 %v716, 127
    %v1099 = vpop.permute.xlu0 %1098
    %1100 = vrot.lane.b32.xlu0 %v717, 127
    %v1101 = vpop.permute.xlu0 %1100
    %v1102 = vsel %vm263, %v1087, %v1095
    %v1103 = vsel %vm263, %v1089, %v1097
    %v1104 = vsel %vm263, %v1091, %v1099
    %v1105 = vsel %vm263, %v1093, %v1101
    %v1106 = vsel %vm263, %v1079, %v1087
    %v1107 = vsel %vm263, %v1081, %v1089
    %v1108 = vsel %vm263, %v1083, %v1091
    %v1109 = vsel %vm263, %v1085, %v1093
    %v1110 = vsel %vm263, %v1071, %v1079
    %v1111 = vsel %vm263, %v1073, %v1081
    %v1112 = vsel %vm263, %v1075, %v1083
    %v1113 = vsel %vm263, %v1077, %v1085
    %v1114 = vsel %vm263, %v1095, %v1071
    %v1115 = vsel %vm263, %v1097, %v1073
    %v1116 = vsel %vm263, %v1099, %v1075
    %v1117 = vsel %vm263, %v1101, %v1077
    %v1118 = vmul.f32 %v1110, %v196
    %v1119 = vmul.f32 %v1106, %v197
    %v1120 = vmul.f32 %v1102, %v198
    %v1121 = vmul.f32 %v1114, %v199
    %v1122 = vmul.f32 %v1111, %v196
    %v1123 = vmul.f32 %v1107, %v197
    %v1124 = vmul.f32 %v1103, %v198
    %v1125 = vmul.f32 %v1115, %v199
    %v1126 = vmul.f32 %v1112, %v196
    %v1127 = vmul.f32 %v1108, %v197
    %v1128 = vmul.f32 %v1104, %v198
    %v1129 = vmul.f32 %v1116, %v199
    %v1130 = vmul.f32 %v1113, %v196
    %v1131 = vmul.f32 %v1109, %v197
    %v1132 = vmul.f32 %v1105, %v198
    %v1133 = vmul.f32 %v1117, %v199
    %v1134 = vld [vmem:[#allocation2] sm:$0xff]
    %v1135 = vld [vmem:[#allocation2 + $0x8] sm:$0xf]
    %v1136 = vld [vmem:[#allocation2 + $0xc] sm:$0xff]
    %v1137 = vld [vmem:[#allocation2 + $0x14] sm:$0xf]
    %v1138 = vld [vmem:[#allocation2 + $0x18] sm:$0xff]
    %v1139 = vld [vmem:[#allocation2 + $0x20] sm:$0xf]
    %v1140 = vld [vmem:[#allocation2 + $0x24] sm:$0xff]
    %v1141 = vld [vmem:[#allocation2 + $0x2c] sm:$0xf]
    %v1142 = vpack.c.bf16 %v770, %v766
    %v1143 = vpack.c.bf16 %v771, %v767
    %v1144 = vpack.c.bf16 %v772, %v768
    %v1145 = vpack.c.bf16 %v773, %v769
    %v1146 = vpack.c.bf16 %v778, %v774
    %v1147 = vpack.c.bf16 %v779, %v775
    %v1148 = vpack.c.bf16 %v780, %v776
    %v1149 = vpack.c.bf16 %v781, %v777
    %v1150 = vpack.c.bf16 %v786, %v782
    %v1151 = vpack.c.bf16 %v787, %v783
    %v1152 = vpack.c.bf16 %v788, %v784
    %v1153 = vpack.c.bf16 %v789, %v785
    %v1154 = vpack.c.bf16 %v794, %v790
    %v1155 = vpack.c.bf16 %v795, %v791
    %v1156 = vpack.c.bf16 %v796, %v792
    %v1157 = vpack.c.bf16 %v797, %v793
    %v1158 = vpack.c.bf16 %v850, %v846
    %v1159 = vpack.c.bf16 %v851, %v847
    %v1160 = vpack.c.bf16 %v852, %v848
    %v1161 = vpack.c.bf16 %v853, %v849
    %v1162 = vpack.c.bf16 %v858, %v854
    %v1163 = vpack.c.bf16 %v859, %v855
    %v1164 = vpack.c.bf16 %v860, %v856
    %v1165 = vpack.c.bf16 %v861, %v857
    %v1166 = vpack.c.bf16 %v914, %v910
    %v1167 = vpack.c.bf16 %v915, %v911
    %v1168 = vpack.c.bf16 %v916, %v912
    %v1169 = vpack.c.bf16 %v917, %v913
    %v1170 = vpack.c.bf16 %v922, %v918
    %v1171 = vpack.c.bf16 %v923, %v919
    %v1172 = vpack.c.bf16 %v924, %v920
    %v1173 = vpack.c.bf16 %v925, %v921
    %v1174 = vpack.c.bf16 %v610, %v606
    %v1175 = vpack.c.bf16 %v611, %v607
    %v1176 = vpack.c.bf16 %v612, %v608
    %v1177 = vpack.c.bf16 %v613, %v609
    %v1178 = vpack.c.bf16 %v618, %v614
    %v1179 = vpack.c.bf16 %v619, %v615
    %v1180 = vpack.c.bf16 %v620, %v616
    %v1181 = vpack.c.bf16 %v621, %v617
    %v1182 = vpack.c.bf16 %v978, %v974
    %v1183 = vpack.c.bf16 %v979, %v975
    %v1184 = vpack.c.bf16 %v980, %v976
    %v1185 = vpack.c.bf16 %v981, %v977
    %v1186 = vpack.c.bf16 %v986, %v982
    %v1187 = vpack.c.bf16 %v987, %v983
    %v1188 = vpack.c.bf16 %v988, %v984
    %v1189 = vpack.c.bf16 %v989, %v985
    %v1190 = vpack.c.bf16 %v1042, %v1038
    %v1191 = vpack.c.bf16 %v1043, %v1039
    %v1192 = vpack.c.bf16 %v1044, %v1040
    %v1193 = vpack.c.bf16 %v1045, %v1041
    %v1194 = vpack.c.bf16 %v1050, %v1046
    %v1195 = vpack.c.bf16 %v1051, %v1047
    %v1196 = vpack.c.bf16 %v1052, %v1048
    %v1197 = vpack.c.bf16 %v1053, %v1049
    %v1198 = vpack.c.bf16 %v1058, %v1054
    %v1199 = vpack.c.bf16 %v1059, %v1055
    %v1200 = vpack.c.bf16 %v1060, %v1056
    %v1201 = vpack.c.bf16 %v1061, %v1057
    %v1202 = vpack.c.bf16 %v1066, %v1062
    %v1203 = vpack.c.bf16 %v1067, %v1063
    %v1204 = vpack.c.bf16 %v1068, %v1064
    %v1205 = vpack.c.bf16 %v1069, %v1065
    %v1206 = vpack.c.bf16 %v1122, %v1118
    %v1207 = vpack.c.bf16 %v1123, %v1119
    %v1208 = vpack.c.bf16 %v1124, %v1120
    %v1209 = vpack.c.bf16 %v1125, %v1121
    %v1210 = vpack.c.bf16 %v1130, %v1126
    %v1211 = vpack.c.bf16 %v1131, %v1127
    %v1212 = vpack.c.bf16 %v1132, %v1128
    %v1213 = vpack.c.bf16 %v1133, %v1129
    %v1214 = vpack.c.bf16 1.0, 1.0
    %v1223 = vunpack.c.l.b16 %v1134
    %v1224 = vunpack.c.h.b16 %v1134
    %v1225 = vunpack.c.l.b16 %v1135
    %v1226 = vunpack.c.l.b16 %v1136
    %v1227 = vunpack.c.h.b16 %v1136
    %v1228 = vunpack.c.l.b16 %v1137
    %v1229 = vunpack.c.l.b16 %v1138
    %v1230 = vunpack.c.h.b16 %v1138
    %v1231 = vunpack.c.l.b16 %v1139
    %v1232 = vunpack.c.l.b16 %v1140
    %v1233 = vunpack.c.h.b16 %v1140
    %v1234 = vunpack.c.l.b16 %v1141
    %v1235 = vpack.c.b16 %v1226, %v1223
    %v1236 = vpack.c.b16 %v1227, %v1224
    %v1237 = vpack.c.b16 %v1228, %v1225
    %v1238 = vpack.c.b16 %v1232, %v1229
    %v1239 = vpack.c.b16 %v1233, %v1230
    %v1240 = vpack.c.b16 %v1234, %v1231
    %vm1245 = vcmask 269312
    %v1247 = vsel %vm1245, %v1237, 0
    %v1250 = vsel %vm1245, %v1240, 0
    %v1252 = vsel 0, 4294967295, 65535
    %v1253 = vsel %vm430, %v1252, 0
    %v1255 = vand.u32 %v1214, %v1253
    %1257 = vmatprep.subr.bf16.mxu0 %v1143
    %1258 = vmatpush1.bf16.msra.mxu0 %v1142
    %1259 = vmatprep.subr.bf16.mxu0 %v1147
    %1260 = vmatpush1.bf16.msra.mxu0 %v1146
    %1261 = vmatprep.subr.bf16.mxu0 %v1151
    %1262 = vmatpush1.bf16.msra.mxu0 %v1150
    %1263 = vmatprep.subr.bf16.mxu0 %v1155
    %1264 = vmatpush1.bf16.msra.mxu0 %v1154
    %1265 = vmatprep.subr.bf16.mxu0 %v1159
    %1266 = vmatpush1.bf16.msra.mxu0 %v1158
    %1267 = vmatprep.subr.bf16.mxu0 %v1163
    %1268 = vmatpush1.bf16.msra.mxu0 %v1162
    %1269 = vmatprep.subr.bf16.mxu0 %v1167
    %1270 = vmatpush1.bf16.msra.mxu0 %v1166
    %1271 = vmatprep.subr.bf16.mxu0 %v1171
    %1272 = vmatpush1.bf16.msra.mxu0 %v1170
    %1273 = vmatprep.subr.bf16.mxu0 %v1175
    %1274 = vmatpush1.bf16.msra.mxu0 %v1174
    %1275 = vmatprep.subr.bf16.mxu0 %v1179
    %1276 = vmatpush1.bf16.msra.mxu0 %v1178
    %1277 = vmatprep.subr.bf16.mxu0 %v1183
    %1278 = vmatpush1.bf16.msra.mxu0 %v1182
    %1279 = vmatprep.subr.bf16.mxu0 %v1187
    %1280 = vmatpush1.bf16.msra.mxu0 %v1186
    %1281 = vmatprep.subr.bf16.mxu0 %v1191
    %1282 = vmatpush1.bf16.msra.mxu0 %v1190
    %1283 = vmatprep.subr.bf16.mxu0 %v1195
    %1284 = vmatpush1.bf16.msra.mxu0 %v1194
    %1285 = vmatprep.subr.bf16.mxu0 %v1199
    %1286 = vmatpush1.bf16.msra.mxu0 %v1198
    %1287 = vmatprep.subr.bf16.mxu0 %v1203
    %1288 = vmatpush1.bf16.msra.mxu0 %v1202
    %1289 = vmatprep.mubr.bf16.mxu0 %v1236
    %1290 = vmatmul.mubr.bf16.gmra.mrb[0].mxu0 %v1235
    %v1291 = vpop.f32.mrb[0].mxu0
    %v1292 = vadd.f32 0.0, %v1291
    %v1293 = vpop.f32.mrb[0].mxu0
    %v1294 = vadd.f32 0.0, %v1293
    %v1295 = vpop.f32.mrb[0].mxu0
    %v1296 = vadd.f32 0.0, %v1295
    %v1297 = vpop.f32.mrb[0].mxu0
    %v1298 = vadd.f32 0.0, %v1297
    %1299 = vmatprep.mubr.bf16.mxu0 %v1239
    %1300 = vmatmul.mubr.bf16.gmra.mrb[0].mxu0 %v1238
    %v1301 = vpop.f32.mrb[0].mxu0
    %v1302 = vadd.f32 0.0, %v1301
    %v1303 = vpop.f32.mrb[0].mxu0
    %v1304 = vadd.f32 0.0, %v1303
    %v1305 = vpop.f32.mrb[0].mxu0
    %v1306 = vadd.f32 0.0, %v1305
    %v1307 = vpop.f32.mrb[0].mxu0
    %v1308 = vadd.f32 0.0, %v1307
    %1309 = vdwg.mxu0
    %1310 = vmatprep.subr.bf16.mxu0 %v1207
    %1311 = vmatpush1.bf16.msra.mxu0 %v1206
    %1312 = vmatprep.subr.bf16.mxu0 %v1211
    %1313 = vmatpush1.bf16.msra.mxu0 %v1210
    %1314 = vmatprep.subr.bf16.mxu0 %v1255
    %1315 = vmatpush1.bf16.msra.mxu0 %v1255
    %1316 = vmatprep.subr.bf16.mxu0 0
    %1317 = vmatpush1.bf16.msra.mxu0 0
    %1318 = vmatprep.subr.bf16.mxu0 0
    %1319 = vmatpush1.bf16.msra.mxu0 0
    %1320 = vmatprep.subr.bf16.mxu0 0
    %1321 = vmatpush1.bf16.msra.mxu0 0
    %1322 = vmatprep.subr.bf16.mxu0 0
    %1323 = vmatpush1.bf16.msra.mxu0 0
    %1324 = vmatprep.subr.bf16.mxu0 0
    %1325 = vmatpush1.bf16.msra.mxu0 0
    %1326 = vmatprep.subr.bf16.mxu0 0
    %1327 = vmatpush1.bf16.msra.mxu0 0
    %1328 = vmatprep.subr.bf16.mxu0 0
    %1329 = vmatpush1.bf16.msra.mxu0 0
    %1330 = vmatprep.subr.bf16.mxu0 0
    %1331 = vmatpush1.bf16.msra.mxu0 0
    %1332 = vmatprep.subr.bf16.mxu0 0
    %1333 = vmatpush1.bf16.msra.mxu0 0
    %1334 = vmatprep.subr.bf16.mxu0 0
    %1335 = vmatpush1.bf16.msra.mxu0 0
    %1336 = vmatprep.subr.bf16.mxu0 0
    %1337 = vmatpush1.bf16.msra.mxu0 0
    %1338 = vmatprep.subr.bf16.mxu0 0
    %1339 = vmatpush1.bf16.msra.mxu0 0
    %1340 = vmatprep.subr.bf16.mxu0 0
    %1341 = vmatpush1.bf16.msra.mxu0 0
    %1342 = vmatprep.mubr.bf16.mxu0 0
    %1343 = vmatmul.mubr.bf16.gmra.mrb[0].mxu0 %v1247
    %v1344 = vpop.f32.mrb[0].mxu0
    %v1345 = vadd.f32 %v1292, %v1344
    %v1346 = vpop.f32.mrb[0].mxu0
    %v1347 = vadd.f32 %v1294, %v1346
    %v1348 = vpop.f32.mrb[0].mxu0
    %v1349 = vadd.f32 %v1296, %v1348
    %v1350 = vpop.f32.mrb[0].mxu0
    %v1351 = vadd.f32 %v1298, %v1350
    %1352 = vmatprep.mubr.bf16.mxu0 0
    %1353 = vmatmul.mubr.bf16.gmra.mrb[0].mxu0 %v1250
    %v1354 = vpop.f32.mrb[0].mxu0
    %v1355 = vadd.f32 %v1302, %v1354
    %v1356 = vpop.f32.mrb[0].mxu0
    %v1357 = vadd.f32 %v1304, %v1356
    %v1358 = vpop.f32.mrb[0].mxu0
    %v1359 = vadd.f32 %v1306, %v1358
    %v1360 = vpop.f32.mrb[0].mxu0
    %v1361 = vadd.f32 %v1308, %v1360
    %1362 = vdwg.mxu0
    %1363 = vmatprep.subr.bf16.mxu0 %v1145
    %1364 = vmatpush1.bf16.msra.mxu0 %v1144
    %1365 = vmatprep.subr.bf16.mxu0 %v1149
    %1366 = vmatpush1.bf16.msra.mxu0 %v1148
    %1367 = vmatprep.subr.bf16.mxu0 %v1153
    %1368 = vmatpush1.bf16.msra.mxu0 %v1152
    %1369 = vmatprep.subr.bf16.mxu0 %v1157
    %1370 = vmatpush1.bf16.msra.mxu0 %v1156
    %1371 = vmatprep.subr.bf16.mxu0 %v1161
    %1372 = vmatpush1.bf16.msra.mxu0 %v1160
    %1373 = vmatprep.subr.bf16.mxu0 %v1165
    %1374 = vmatpush1.bf16.msra.mxu0 %v1164
    %1375 = vmatprep.subr.bf16.mxu0 %v1169
    %1376 = vmatpush1.bf16.msra.mxu0 %v1168
    %1377 = vmatprep.subr.bf16.mxu0 %v1173
    %1378 = vmatpush1.bf16.msra.mxu0 %v1172
    %1379 = vmatprep.subr.bf16.mxu0 %v1177
    %1380 = vmatpush1.bf16.msra.mxu0 %v1176
    %1381 = vmatprep.subr.bf16.mxu0 %v1181
    %1382 = vmatpush1.bf16.msra.mxu0 %v1180
    %1383 = vmatprep.subr.bf16.mxu0 %v1185
    %1384 = vmatpush1.bf16.msra.mxu0 %v1184
    %1385 = vmatprep.subr.bf16.mxu0 %v1189
    %1386 = vmatpush1.bf16.msra.mxu0 %v1188
    %1387 = vmatprep.subr.bf16.mxu0 %v1193
    %1388 = vmatpush1.bf16.msra.mxu0 %v1192
    %1389 = vmatprep.subr.bf16.mxu0 %v1197
    %1390 = vmatpush1.bf16.msra.mxu0 %v1196
    %1391 = vmatprep.subr.bf16.mxu0 %v1201
    %1392 = vmatpush1.bf16.msra.mxu0 %v1200
    %1393 = vmatprep.subr.bf16.mxu0 %v1205
    %1394 = vmatpush1.bf16.msra.mxu0 %v1204
    %1395 = vmatprep.mubr.bf16.mxu0 %v1236
    %1396 = vmatmul.mubr.bf16.gmra.mrb[0].mxu0 %v1235
    %v1397 = vpop.f32.mrb[0].mxu0
    %v1398 = vadd.f32 0.0, %v1397
    %v1399 = vpop.f32.mrb[0].mxu0
    %v1400 = vadd.f32 0.0, %v1399
    %v1401 = vpop.f32.mrb[0].mxu0
    %v1402 = vadd.f32 0.0, %v1401
    %v1403 = vpop.f32.mrb[0].mxu0
    %v1404 = vadd.f32 0.0, %v1403
    %1405 = vmatprep.mubr.bf16.mxu0 %v1239
    %1406 = vmatmul.mubr.bf16.gmra.mrb[0].mxu0 %v1238
    %v1407 = vpop.f32.mrb[0].mxu0
    %v1408 = vadd.f32 0.0, %v1407
    %v1409 = vpop.f32.mrb[0].mxu0
    %v1410 = vadd.f32 0.0, %v1409
    %v1411 = vpop.f32.mrb[0].mxu0
    %v1412 = vadd.f32 0.0, %v1411
    %v1413 = vpop.f32.mrb[0].mxu0
    %v1414 = vadd.f32 0.0, %v1413
    %1415 = vdwg.mxu0
    %1416 = vmatprep.subr.bf16.mxu0 %v1209
    %1417 = vmatpush1.bf16.msra.mxu0 %v1208
    %1418 = vmatprep.subr.bf16.mxu0 %v1213
    %1419 = vmatpush1.bf16.msra.mxu0 %v1212
    %1420 = vmatprep.subr.bf16.mxu0 %v1255
    %1421 = vmatpush1.bf16.msra.mxu0 %v1255
    %1422 = vmatprep.subr.bf16.mxu0 0
    %1423 = vmatpush1.bf16.msra.mxu0 0
    %1424 = vmatprep.subr.bf16.mxu0 0
    %1425 = vmatpush1.bf16.msra.mxu0 0
    %1426 = vmatprep.subr.bf16.mxu0 0
    %1427 = vmatpush1.bf16.msra.mxu0 0
    %1428 = vmatprep.subr.bf16.mxu0 0
    %1429 = vmatpush1.bf16.msra.mxu0 0
    %1430 = vmatprep.subr.bf16.mxu0 0
    %1431 = vmatpush1.bf16.msra.mxu0 0
    %1432 = vmatprep.subr.bf16.mxu0 0
    %1433 = vmatpush1.bf16.msra.mxu0 0
    %1434 = vmatprep.subr.bf16.mxu0 0
    %1435 = vmatpush1.bf16.msra.mxu0 0
    %1436 = vmatprep.subr.bf16.mxu0 0
    %1437 = vmatpush1.bf16.msra.mxu0 0
    %1438 = vmatprep.subr.bf16.mxu0 0
    %1439 = vmatpush1.bf16.msra.mxu0 0
    %1440 = vmatprep.subr.bf16.mxu0 0
    %1441 = vmatpush1.bf16.msra.mxu0 0
    %1442 = vmatprep.subr.bf16.mxu0 0
    %1443 = vmatpush1.bf16.msra.mxu0 0
    %1444 = vmatprep.subr.bf16.mxu0 0
    %1445 = vmatpush1.bf16.msra.mxu0 0
    %1446 = vmatprep.subr.bf16.mxu0 0
    %1447 = vmatpush1.bf16.msra.mxu0 0
    %1448 = vmatprep.mubr.bf16.mxu0 0
    %1449 = vmatmul.mubr.bf16.gmra.mrb[0].mxu0 %v1247
    %v1450 = vpop.f32.mrb[0].mxu0
    %v1451 = vadd.f32 %v1398, %v1450
    %v1452 = vpop.f32.mrb[0].mxu0
    %v1453 = vadd.f32 %v1400, %v1452
    %v1454 = vpop.f32.mrb[0].mxu0
    %v1455 = vadd.f32 %v1402, %v1454
    %v1456 = vpop.f32.mrb[0].mxu0
    %v1457 = vadd.f32 %v1404, %v1456
    %1458 = vmatprep.mubr.bf16.mxu0 0
    %1459 = vmatmul.mubr.bf16.gmra.mrb[0].mxu0 %v1250
    %v1460 = vpop.f32.mrb[0].mxu0
    %v1461 = vadd.f32 %v1408, %v1460
    %v1462 = vpop.f32.mrb[0].mxu0
    %v1463 = vadd.f32 %v1410, %v1462
    %v1464 = vpop.f32.mrb[0].mxu0
    %v1465 = vadd.f32 %v1412, %v1464
    %v1466 = vpop.f32.mrb[0].mxu0
    %v1467 = vadd.f32 %v1414, %v1466
    %1468 = vdwg.mxu0
    %v1469 = vmax.f32 %v1345, 0.0
    %v1470 = vmax.f32 %v1347, 0.0
    %v1471 = vmax.f32 %v1451, 0.0
    %v1472 = vmax.f32 %v1453, 0.0
    %v1473 = vmax.f32 %v1349, 0.0
    %v1474 = vmax.f32 %v1351, 0.0
    %v1475 = vmax.f32 %v1455, 0.0
    %v1476 = vmax.f32 %v1457, 0.0
    %v1477 = vmax.f32 %v1355, 0.0
    %v1478 = vmax.f32 %v1357, 0.0
    %v1479 = vmax.f32 %v1461, 0.0
    %v1480 = vmax.f32 %v1463, 0.0
    %v1481 = vmax.f32 %v1359, 0.0
    %v1482 = vmax.f32 %v1361, 0.0
    %v1483 = vmax.f32 %v1465, 0.0
    %v1484 = vmax.f32 %v1467, 0.0
    %1485 = vrot.lane.b32.xlu0 %v1469, 16
    %v1486 = vpop.permute.xlu0 %1485
    %1487 = vrot.lane.b32.xlu0 %v1473, 16
    %v1488 = vpop.permute.xlu0 %1487
    %1489 = vrot.lane.b32.xlu0 %v1477, 16
    %v1490 = vpop.permute.xlu0 %1489
    %1491 = vrot.lane.b32.xlu0 %v1481, 16
    %v1492 = vpop.permute.xlu0 %1491
    %1493 = vrot.lane.b32.xlu0 %v1470, 16
    %v1494 = vpop.permute.xlu0 %1493
    %1495 = vrot.lane.b32.xlu0 %v1474, 16
    %v1496 = vpop.permute.xlu0 %1495
    %1497 = vrot.lane.b32.xlu0 %v1478, 16
    %v1498 = vpop.permute.xlu0 %1497
    %1499 = vrot.lane.b32.xlu0 %v1482, 16
    %v1500 = vpop.permute.xlu0 %1499
    %1501 = vrot.lane.b32.xlu0 %v1471, 16
    %v1502 = vpop.permute.xlu0 %1501
    %1503 = vrot.lane.b32.xlu0 %v1475, 16
    %v1504 = vpop.permute.xlu0 %1503
    %1505 = vrot.lane.b32.xlu0 %v1479, 16
    %v1506 = vpop.permute.xlu0 %1505
    %1507 = vrot.lane.b32.xlu0 %v1483, 16
    %v1508 = vpop.permute.xlu0 %1507
    %1509 = vrot.lane.b32.xlu0 %v1472, 16
    %v1510 = vpop.permute.xlu0 %1509
    %1511 = vrot.lane.b32.xlu0 %v1476, 16
    %v1512 = vpop.permute.xlu0 %1511
    %1513 = vrot.lane.b32.xlu0 %v1480, 16
    %v1514 = vpop.permute.xlu0 %1513
    %1515 = vrot.lane.b32.xlu0 %v1484, 16
    %v1516 = vpop.permute.xlu0 %1515
    %v1517 = vsel %vm216, %v1502, %v1510
    %v1518 = vsel %vm216, %v1504, %v1512
    %v1519 = vsel %vm216, %v1506, %v1514
    %v1520 = vsel %vm216, %v1508, %v1516
    %v1521 = vsel %vm216, %v1494, %v1502
    %v1522 = vsel %vm216, %v1496, %v1504
    %v1523 = vsel %vm216, %v1498, %v1506
    %v1524 = vsel %vm216, %v1500, %v1508
    %v1525 = vsel %vm216, %v1486, %v1494
    %v1526 = vsel %vm216, %v1488, %v1496
    %v1527 = vsel %vm216, %v1490, %v1498
    %v1528 = vsel %vm216, %v1492, %v1500
    %v1529 = vsel %vm216, %v1510, %v1486
    %v1530 = vsel %vm216, %v1512, %v1488
    %v1531 = vsel %vm216, %v1514, %v1490
    %v1532 = vsel %vm216, %v1516, %v1492
    %1533 = vrot.lane.b32.xlu0 %v1469, 112
    %v1534 = vpop.permute.xlu0 %1533
    %1535 = vrot.lane.b32.xlu0 %v1473, 112
    %v1536 = vpop.permute.xlu0 %1535
    %1537 = vrot.lane.b32.xlu0 %v1477, 112
    %v1538 = vpop.permute.xlu0 %1537
    %1539 = vrot.lane.b32.xlu0 %v1481, 112
    %v1540 = vpop.permute.xlu0 %1539
    %1541 = vrot.lane.b32.xlu0 %v1470, 112
    %v1542 = vpop.permute.xlu0 %1541
    %1543 = vrot.lane.b32.xlu0 %v1474, 112
    %v1544 = vpop.permute.xlu0 %1543
    %1545 = vrot.lane.b32.xlu0 %v1478, 112
    %v1546 = vpop.permute.xlu0 %1545
    %1547 = vrot.lane.b32.xlu0 %v1482, 112
    %v1548 = vpop.permute.xlu0 %1547
    %1549 = vrot.lane.b32.xlu0 %v1471, 112
    %v1550 = vpop.permute.xlu0 %1549
    %1551 = vrot.lane.b32.xlu0 %v1475, 112
    %v1552 = vpop.permute.xlu0 %1551
    %1553 = vrot.lane.b32.xlu0 %v1479, 112
    %v1554 = vpop.permute.xlu0 %1553
    %1555 = vrot.lane.b32.xlu0 %v1483, 112
    %v1556 = vpop.permute.xlu0 %1555
    %1557 = vrot.lane.b32.xlu0 %v1472, 112
    %v1558 = vpop.permute.xlu0 %1557
    %1559 = vrot.lane.b32.xlu0 %v1476, 112
    %v1560 = vpop.permute.xlu0 %1559
    %1561 = vrot.lane.b32.xlu0 %v1480, 112
    %v1562 = vpop.permute.xlu0 %1561
    %1563 = vrot.lane.b32.xlu0 %v1484, 112
    %v1564 = vpop.permute.xlu0 %1563
    %v1565 = vsel %vm229, %v1550, %v1558
    %v1566 = vsel %vm229, %v1552, %v1560
    %v1567 = vsel %vm229, %v1554, %v1562
    %v1568 = vsel %vm229, %v1556, %v1564
    %v1569 = vsel %vm229, %v1542, %v1550
    %v1570 = vsel %vm229, %v1544, %v1552
    %v1571 = vsel %vm229, %v1546, %v1554
    %v1572 = vsel %vm229, %v1548, %v1556
    %v1573 = vsel %vm229, %v1534, %v1542
    %v1574 = vsel %vm229, %v1536, %v1544
    %v1575 = vsel %vm229, %v1538, %v1546
    %v1576 = vsel %vm229, %v1540, %v1548
    %v1577 = vsel %vm229, %v1558, %v1534
    %v1578 = vsel %vm229, %v1560, %v1536
    %v1579 = vsel %vm229, %v1562, %v1538
    %v1580 = vsel %vm229, %v1564, %v1540
    %1581 = vrot.lane.b32.xlu0 %v1529, 1
    %v1582 = vpop.permute.xlu0 %1581
    %1583 = vrot.lane.b32.xlu0 %v1530, 1
    %v1584 = vpop.permute.xlu0 %1583
    %1585 = vrot.lane.b32.xlu0 %v1531, 1
    %v1586 = vpop.permute.xlu0 %1585
    %1587 = vrot.lane.b32.xlu0 %v1532, 1
    %v1588 = vpop.permute.xlu0 %1587
    %1589 = vrot.lane.b32.xlu0 %v1525, 1
    %v1590 = vpop.permute.xlu0 %1589
    %1591 = vrot.lane.b32.xlu0 %v1526, 1
    %v1592 = vpop.permute.xlu0 %1591
    %1593 = vrot.lane.b32.xlu0 %v1527, 1
    %v1594 = vpop.permute.xlu0 %1593
    %1595 = vrot.lane.b32.xlu0 %v1528, 1
    %v1596 = vpop.permute.xlu0 %1595
    %1597 = vrot.lane.b32.xlu0 %v1521, 1
    %v1598 = vpop.permute.xlu0 %1597
    %1599 = vrot.lane.b32.xlu0 %v1522, 1
    %v1600 = vpop.permute.xlu0 %1599
    %1601 = vrot.lane.b32.xlu0 %v1523, 1
    %v1602 = vpop.permute.xlu0 %1601
    %1603 = vrot.lane.b32.xlu0 %v1524, 1
    %v1604 = vpop.permute.xlu0 %1603
    %1605 = vrot.lane.b32.xlu0 %v1517, 1
    %v1606 = vpop.permute.xlu0 %1605
    %1607 = vrot.lane.b32.xlu0 %v1518, 1
    %v1608 = vpop.permute.xlu0 %1607
    %1609 = vrot.lane.b32.xlu0 %v1519, 1
    %v1610 = vpop.permute.xlu0 %1609
    %1611 = vrot.lane.b32.xlu0 %v1520, 1
    %v1612 = vpop.permute.xlu0 %1611
    %v1613 = vsel %vm242, %v1598, %v1606
    %v1614 = vsel %vm242, %v1600, %v1608
    %v1615 = vsel %vm242, %v1602, %v1610
    %v1616 = vsel %vm242, %v1604, %v1612
    %v1617 = vsel %vm242, %v1590, %v1598
    %v1618 = vsel %vm242, %v1592, %v1600
    %v1619 = vsel %vm242, %v1594, %v1602
    %v1620 = vsel %vm242, %v1596, %v1604
    %v1621 = vsel %vm242, %v1582, %v1590
    %v1622 = vsel %vm242, %v1584, %v1592
    %v1623 = vsel %vm242, %v1586, %v1594
    %v1624 = vsel %vm242, %v1588, %v1596
    %v1625 = vsel %vm242, %v1606, %v1582
    %v1626 = vsel %vm242, %v1608, %v1584
    %v1627 = vsel %vm242, %v1610, %v1586
    %v1628 = vsel %vm242, %v1612, %v1588
    %v1629 = vmul.f32 %v1625, %v184
    %v1630 = vmul.f32 %v1621, %v185
    %v1631 = vmul.f32 %v1617, %v186
    %v1632 = vmul.f32 %v1613, %v187
    %v1633 = vmul.f32 %v1626, %v184
    %v1634 = vmul.f32 %v1622, %v185
    %v1635 = vmul.f32 %v1618, %v186
    %v1636 = vmul.f32 %v1614, %v187
    %v1637 = vmul.f32 %v1627, %v184
    %v1638 = vmul.f32 %v1623, %v185
    %v1639 = vmul.f32 %v1619, %v186
    %v1640 = vmul.f32 %v1615, %v187
    %v1641 = vmul.f32 %v1628, %v184
    %v1642 = vmul.f32 %v1624, %v185
    %v1643 = vmul.f32 %v1620, %v186
    %v1644 = vmul.f32 %v1616, %v187
    %v1645 = vmul.f32 %v1529, %v144
    %v1646 = vmul.f32 %v1525, %v145
    %v1647 = vmul.f32 %v1521, %v146
    %v1648 = vmul.f32 %v1517, %v147
    %v1649 = vmul.f32 %v1530, %v144
    %v1650 = vmul.f32 %v1526, %v145
    %v1651 = vmul.f32 %v1522, %v146
    %v1652 = vmul.f32 %v1518, %v147
    %v1653 = vmul.f32 %v1531, %v144
    %v1654 = vmul.f32 %v1527, %v145
    %v1655 = vmul.f32 %v1523, %v146
    %v1656 = vmul.f32 %v1519, %v147
    %v1657 = vmul.f32 %v1532, %v144
    %v1658 = vmul.f32 %v1528, %v145
    %v1659 = vmul.f32 %v1524, %v146
    %v1660 = vmul.f32 %v1520, %v147
    %1661 = vrot.lane.b32.xlu0 %v1529, 127
    %v1662 = vpop.permute.xlu0 %1661
    %1663 = vrot.lane.b32.xlu0 %v1530, 127
    %v1664 = vpop.permute.xlu0 %1663
    %1665 = vrot.lane.b32.xlu0 %v1531, 127
    %v1666 = vpop.permute.xlu0 %1665
    %1667 = vrot.lane.b32.xlu0 %v1532, 127
    %v1668 = vpop.permute.xlu0 %1667
    %1669 = vrot.lane.b32.xlu0 %v1525, 127
    %v1670 = vpop.permute.xlu0 %1669
    %1671 = vrot.lane.b32.xlu0 %v1526, 127
    %v1672 = vpop.permute.xlu0 %1671
    %1673 = vrot.lane.b32.xlu0 %v1527, 127
    %v1674 = vpop.permute.xlu0 %1673
    %1675 = vrot.lane.b32.xlu0 %v1528, 127
    %v1676 = vpop.permute.xlu0 %1675
    %1677 = vrot.lane.b32.xlu0 %v1521, 127
    %v1678 = vpop.permute.xlu0 %1677
    %1679 = vrot.lane.b32.xlu0 %v1522, 127
    %v1680 = vpop.permute.xlu0 %1679
    %1681 = vrot.lane.b32.xlu0 %v1523, 127
    %v1682 = vpop.permute.xlu0 %1681
    %1683 = vrot.lane.b32.xlu0 %v1524, 127
    %v1684 = vpop.permute.xlu0 %1683
    %1685 = vrot.lane.b32.xlu0 %v1517, 127
    %v1686 = vpop.permute.xlu0 %1685
    %1687 = vrot.lane.b32.xlu0 %v1518, 127
    %v1688 = vpop.permute.xlu0 %1687
    %1689 = vrot.lane.b32.xlu0 %v1519, 127
    %v1690 = vpop.permute.xlu0 %1689
    %1691 = vrot.lane.b32.xlu0 %v1520, 127
    %v1692 = vpop.permute.xlu0 %1691
    %v1693 = vsel %vm263, %v1678, %v1686
    %v1694 = vsel %vm263, %v1680, %v1688
    %v1695 = vsel %vm263, %v1682, %v1690
    %v1696 = vsel %vm263, %v1684, %v1692
    %v1697 = vsel %vm263, %v1670, %v1678
    %v1698 = vsel %vm263, %v1672, %v1680
    %v1699 = vsel %vm263, %v1674, %v1682
    %v1700 = vsel %vm263, %v1676, %v1684
    %v1701 = vsel %vm263, %v1662, %v1670
    %v1702 = vsel %vm263, %v1664, %v1672
    %v1703 = vsel %vm263, %v1666, %v1674
    %v1704 = vsel %vm263, %v1668, %v1676
    %v1705 = vsel %vm263, %v1686, %v1662
    %v1706 = vsel %vm263, %v1688, %v1664
    %v1707 = vsel %vm263, %v1690, %v1666
    %v1708 = vsel %vm263, %v1692, %v1668
    %v1709 = vmul.f32 %v1701, %v188
    %v1710 = vmul.f32 %v1697, %v189
    %v1711 = vmul.f32 %v1693, %v190
    %v1712 = vmul.f32 %v1705, %v191
    %v1713 = vmul.f32 %v1702, %v188
    %v1714 = vmul.f32 %v1698, %v189
    %v1715 = vmul.f32 %v1694, %v190
    %v1716 = vmul.f32 %v1706, %v191
    %v1717 = vmul.f32 %v1703, %v188
    %v1718 = vmul.f32 %v1699, %v189
    %v1719 = vmul.f32 %v1695, %v190
    %v1720 = vmul.f32 %v1707, %v191
    %v1721 = vmul.f32 %v1704, %v188
    %v1722 = vmul.f32 %v1700, %v189
    %v1723 = vmul.f32 %v1696, %v190
    %v1724 = vmul.f32 %v1708, %v191
    %1725 = vrot.lane.b32.xlu0 %v1469, 1
    %v1726 = vpop.permute.xlu0 %1725
    %1727 = vrot.lane.b32.xlu0 %v1473, 1
    %v1728 = vpop.permute.xlu0 %1727
    %1729 = vrot.lane.b32.xlu0 %v1477, 1
    %v1730 = vpop.permute.xlu0 %1729
    %1731 = vrot.lane.b32.xlu0 %v1481, 1
    %v1732 = vpop.permute.xlu0 %1731
    %1733 = vrot.lane.b32.xlu0 %v1470, 1
    %v1734 = vpop.permute.xlu0 %1733
    %1735 = vrot.lane.b32.xlu0 %v1474, 1
    %v1736 = vpop.permute.xlu0 %1735
    %1737 = vrot.lane.b32.xlu0 %v1478, 1
    %v1738 = vpop.permute.xlu0 %1737
    %1739 = vrot.lane.b32.xlu0 %v1482, 1
    %v1740 = vpop.permute.xlu0 %1739
    %1741 = vrot.lane.b32.xlu0 %v1471, 1
    %v1742 = vpop.permute.xlu0 %1741
    %1743 = vrot.lane.b32.xlu0 %v1475, 1
    %v1744 = vpop.permute.xlu0 %1743
    %1745 = vrot.lane.b32.xlu0 %v1479, 1
    %v1746 = vpop.permute.xlu0 %1745
    %1747 = vrot.lane.b32.xlu0 %v1483, 1
    %v1748 = vpop.permute.xlu0 %1747
    %1749 = vrot.lane.b32.xlu0 %v1472, 1
    %v1750 = vpop.permute.xlu0 %1749
    %1751 = vrot.lane.b32.xlu0 %v1476, 1
    %v1752 = vpop.permute.xlu0 %1751
    %1753 = vrot.lane.b32.xlu0 %v1480, 1
    %v1754 = vpop.permute.xlu0 %1753
    %1755 = vrot.lane.b32.xlu0 %v1484, 1
    %v1756 = vpop.permute.xlu0 %1755
    %v1757 = vsel %vm242, %v1742, %v1750
    %v1758 = vsel %vm242, %v1744, %v1752
    %v1759 = vsel %vm242, %v1746, %v1754
    %v1760 = vsel %vm242, %v1748, %v1756
    %v1761 = vsel %vm242, %v1734, %v1742
    %v1762 = vsel %vm242, %v1736, %v1744
    %v1763 = vsel %vm242, %v1738, %v1746
    %v1764 = vsel %vm242, %v1740, %v1748
    %v1765 = vsel %vm242, %v1726, %v1734
    %v1766 = vsel %vm242, %v1728, %v1736
    %v1767 = vsel %vm242, %v1730, %v1738
    %v1768 = vsel %vm242, %v1732, %v1740
    %v1769 = vsel %vm242, %v1750, %v1726
    %v1770 = vsel %vm242, %v1752, %v1728
    %v1771 = vsel %vm242, %v1754, %v1730
    %v1772 = vsel %vm242, %v1756, %v1732
    %v1773 = vmul.f32 %v1769, %v168
    %v1774 = vmul.f32 %v1765, %v169
    %v1775 = vmul.f32 %v1761, %v170
    %v1776 = vmul.f32 %v1757, %v171
    %v1777 = vmul.f32 %v1770, %v168
    %v1778 = vmul.f32 %v1766, %v169
    %v1779 = vmul.f32 %v1762, %v170
    %v1780 = vmul.f32 %v1758, %v171
    %v1781 = vmul.f32 %v1771, %v168
    %v1782 = vmul.f32 %v1767, %v169
    %v1783 = vmul.f32 %v1763, %v170
    %v1784 = vmul.f32 %v1759, %v171
    %v1785 = vmul.f32 %v1772, %v168
    %v1786 = vmul.f32 %v1768, %v169
    %v1787 = vmul.f32 %v1764, %v170
    %v1788 = vmul.f32 %v1760, %v171
    %1789 = vrot.lane.b32.xlu0 %v1469, 127
    %v1790 = vpop.permute.xlu0 %1789
    %1791 = vrot.lane.b32.xlu0 %v1473, 127
    %v1792 = vpop.permute.xlu0 %1791
    %1793 = vrot.lane.b32.xlu0 %v1477, 127
    %v1794 = vpop.permute.xlu0 %1793
    %1795 = vrot.lane.b32.xlu0 %v1481, 127
    %v1796 = vpop.permute.xlu0 %1795
    %1797 = vrot.lane.b32.xlu0 %v1470, 127
    %v1798 = vpop.permute.xlu0 %1797
    %1799 = vrot.lane.b32.xlu0 %v1474, 127
    %v1800 = vpop.permute.xlu0 %1799
    %1801 = vrot.lane.b32.xlu0 %v1478, 127
    %v1802 = vpop.permute.xlu0 %1801
    %1803 = vrot.lane.b32.xlu0 %v1482, 127
    %v1804 = vpop.permute.xlu0 %1803
    %1805 = vrot.lane.b32.xlu0 %v1471, 127
    %v1806 = vpop.permute.xlu0 %1805
    %1807 = vrot.lane.b32.xlu0 %v1475, 127
    %v1808 = vpop.permute.xlu0 %1807
    %1809 = vrot.lane.b32.xlu0 %v1479, 127
    %v1810 = vpop.permute.xlu0 %1809
    %1811 = vrot.lane.b32.xlu0 %v1483, 127
    %v1812 = vpop.permute.xlu0 %1811
    %1813 = vrot.lane.b32.xlu0 %v1472, 127
    %v1814 = vpop.permute.xlu0 %1813
    %1815 = vrot.lane.b32.xlu0 %v1476, 127
    %v1816 = vpop.permute.xlu0 %1815
    %1817 = vrot.lane.b32.xlu0 %v1480, 127
    %v1818 = vpop.permute.xlu0 %1817
    %1819 = vrot.lane.b32.xlu0 %v1484, 127
    %v1820 = vpop.permute.xlu0 %1819
    %v1821 = vsel %vm263, %v1806, %v1814
    %v1822 = vsel %vm263, %v1808, %v1816
    %v1823 = vsel %vm263, %v1810, %v1818
    %v1824 = vsel %vm263, %v1812, %v1820
    %v1825 = vsel %vm263, %v1798, %v1806
    %v1826 = vsel %vm263, %v1800, %v1808
    %v1827 = vsel %vm263, %v1802, %v1810
    %v1828 = vsel %vm263, %v1804, %v1812
    %v1829 = vsel %vm263, %v1790, %v1798
    %v1830 = vsel %vm263, %v1792, %v1800
    %v1831 = vsel %vm263, %v1794, %v1802
    %v1832 = vsel %vm263, %v1796, %v1804
    %v1833 = vsel %vm263, %v1814, %v1790
    %v1834 = vsel %vm263, %v1816, %v1792
    %v1835 = vsel %vm263, %v1818, %v1794
    %v1836 = vsel %vm263, %v1820, %v1796
    %v1837 = vmul.f32 %v1829, %v180
    %v1838 = vmul.f32 %v1825, %v181
    %v1839 = vmul.f32 %v1821, %v182
    %v1840 = vmul.f32 %v1833, %v183
    %v1841 = vmul.f32 %v1830, %v180
    %v1842 = vmul.f32 %v1826, %v181
    %v1843 = vmul.f32 %v1822, %v182
    %v1844 = vmul.f32 %v1834, %v183
    %v1845 = vmul.f32 %v1831, %v180
    %v1846 = vmul.f32 %v1827, %v181
    %v1847 = vmul.f32 %v1823, %v182
    %v1848 = vmul.f32 %v1835, %v183
    %v1849 = vmul.f32 %v1832, %v180
    %v1850 = vmul.f32 %v1828, %v181
    %v1851 = vmul.f32 %v1824, %v182
    %v1852 = vmul.f32 %v1836, %v183
    %1853 = vrot.lane.b32.xlu0 %v1573, 1
    %v1854 = vpop.permute.xlu0 %1853
    %1855 = vrot.lane.b32.xlu0 %v1574, 1
    %v1856 = vpop.permute.xlu0 %1855
    %1857 = vrot.lane.b32.xlu0 %v1575, 1
    %v1858 = vpop.permute.xlu0 %1857
    %1859 = vrot.lane.b32.xlu0 %v1576, 1
    %v1860 = vpop.permute.xlu0 %1859
    %1861 = vrot.lane.b32.xlu0 %v1569, 1
    %v1862 = vpop.permute.xlu0 %1861
    %1863 = vrot.lane.b32.xlu0 %v1570, 1
    %v1864 = vpop.permute.xlu0 %1863
    %1865 = vrot.lane.b32.xlu0 %v1571, 1
    %v1866 = vpop.permute.xlu0 %1865
    %1867 = vrot.lane.b32.xlu0 %v1572, 1
    %v1868 = vpop.permute.xlu0 %1867
    %1869 = vrot.lane.b32.xlu0 %v1565, 1
    %v1870 = vpop.permute.xlu0 %1869
    %1871 = vrot.lane.b32.xlu0 %v1566, 1
    %v1872 = vpop.permute.xlu0 %1871
    %1873 = vrot.lane.b32.xlu0 %v1567, 1
    %v1874 = vpop.permute.xlu0 %1873
    %1875 = vrot.lane.b32.xlu0 %v1568, 1
    %v1876 = vpop.permute.xlu0 %1875
    %1877 = vrot.lane.b32.xlu0 %v1577, 1
    %v1878 = vpop.permute.xlu0 %1877
    %1879 = vrot.lane.b32.xlu0 %v1578, 1
    %v1880 = vpop.permute.xlu0 %1879
    %1881 = vrot.lane.b32.xlu0 %v1579, 1
    %v1882 = vpop.permute.xlu0 %1881
    %1883 = vrot.lane.b32.xlu0 %v1580, 1
    %v1884 = vpop.permute.xlu0 %1883
    %v1885 = vsel %vm242, %v1870, %v1878
    %v1886 = vsel %vm242, %v1872, %v1880
    %v1887 = vsel %vm242, %v1874, %v1882
    %v1888 = vsel %vm242, %v1876, %v1884
    %v1889 = vsel %vm242, %v1862, %v1870
    %v1890 = vsel %vm242, %v1864, %v1872
    %v1891 = vsel %vm242, %v1866, %v1874
    %v1892 = vsel %vm242, %v1868, %v1876
    %v1893 = vsel %vm242, %v1854, %v1862
    %v1894 = vsel %vm242, %v1856, %v1864
    %v1895 = vsel %vm242, %v1858, %v1866
    %v1896 = vsel %vm242, %v1860, %v1868
    %v1897 = vsel %vm242, %v1878, %v1854
    %v1898 = vsel %vm242, %v1880, %v1856
    %v1899 = vsel %vm242, %v1882, %v1858
    %v1900 = vsel %vm242, %v1884, %v1860
    %v1901 = vmul.f32 %v1897, %v192
    %v1902 = vmul.f32 %v1893, %v193
    %v1903 = vmul.f32 %v1889, %v194
    %v1904 = vmul.f32 %v1885, %v195
    %v1905 = vmul.f32 %v1898, %v192
    %v1906 = vmul.f32 %v1894, %v193
    %v1907 = vmul.f32 %v1890, %v194
    %v1908 = vmul.f32 %v1886, %v195
    %v1909 = vmul.f32 %v1899, %v192
    %v1910 = vmul.f32 %v1895, %v193
    %v1911 = vmul.f32 %v1891, %v194
    %v1912 = vmul.f32 %v1887, %v195
    %v1913 = vmul.f32 %v1900, %v192
    %v1914 = vmul.f32 %v1896, %v193
    %v1915 = vmul.f32 %v1892, %v194
    %v1916 = vmul.f32 %v1888, %v195
    %v1917 = vmul.f32 %v1573, %v156
    %v1918 = vmul.f32 %v1569, %v157
    %v1919 = vmul.f32 %v1565, %v158
    %v1920 = vmul.f32 %v1577, %v159
    %v1921 = vmul.f32 %v1574, %v156
    %v1922 = vmul.f32 %v1570, %v157
    %v1923 = vmul.f32 %v1566, %v158
    %v1924 = vmul.f32 %v1578, %v159
    %v1925 = vmul.f32 %v1575, %v156
    %v1926 = vmul.f32 %v1571, %v157
    %v1927 = vmul.f32 %v1567, %v158
    %v1928 = vmul.f32 %v1579, %v159
    %v1929 = vmul.f32 %v1576, %v156
    %v1930 = vmul.f32 %v1572, %v157
    %v1931 = vmul.f32 %v1568, %v158
    %v1932 = vmul.f32 %v1580, %v159
    %1933 = vrot.lane.b32.xlu0 %v1573, 127
    %v1934 = vpop.permute.xlu0 %1933
    %1935 = vrot.lane.b32.xlu0 %v1574, 127
    %v1936 = vpop.permute.xlu0 %1935
    %1937 = vrot.lane.b32.xlu0 %v1575, 127
    %v1938 = vpop.permute.xlu0 %1937
    %1939 = vrot.lane.b32.xlu0 %v1576, 127
    %v1940 = vpop.permute.xlu0 %1939
    %1941 = vrot.lane.b32.xlu0 %v1569, 127
    %v1942 = vpop.permute.xlu0 %1941
    %1943 = vrot.lane.b32.xlu0 %v1570, 127
    %v1944 = vpop.permute.xlu0 %1943
    %1945 = vrot.lane.b32.xlu0 %v1571, 127
    %v1946 = vpop.permute.xlu0 %1945
    %1947 = vrot.lane.b32.xlu0 %v1572, 127
    %v1948 = vpop.permute.xlu0 %1947
    %1949 = vrot.lane.b32.xlu0 %v1565, 127
    %v1950 = vpop.permute.xlu0 %1949
    %1951 = vrot.lane.b32.xlu0 %v1566, 127
    %v1952 = vpop.permute.xlu0 %1951
    %1953 = vrot.lane.b32.xlu0 %v1567, 127
    %v1954 = vpop.permute.xlu0 %1953
    %1955 = vrot.lane.b32.xlu0 %v1568, 127
    %v1956 = vpop.permute.xlu0 %1955
    %1957 = vrot.lane.b32.xlu0 %v1577, 127
    %v1958 = vpop.permute.xlu0 %1957
    %1959 = vrot.lane.b32.xlu0 %v1578, 127
    %v1960 = vpop.permute.xlu0 %1959
    %1961 = vrot.lane.b32.xlu0 %v1579, 127
    %v1962 = vpop.permute.xlu0 %1961
    %1963 = vrot.lane.b32.xlu0 %v1580, 127
    %v1964 = vpop.permute.xlu0 %1963
    %v1965 = vsel %vm263, %v1950, %v1958
    %v1966 = vsel %vm263, %v1952, %v1960
    %v1967 = vsel %vm263, %v1954, %v1962
    %v1968 = vsel %vm263, %v1956, %v1964
    %v1969 = vsel %vm263, %v1942, %v1950
    %v1970 = vsel %vm263, %v1944, %v1952
    %v1971 = vsel %vm263, %v1946, %v1954
    %v1972 = vsel %vm263, %v1948, %v1956
    %v1973 = vsel %vm263, %v1934, %v1942
    %v1974 = vsel %vm263, %v1936, %v1944
    %v1975 = vsel %vm263, %v1938, %v1946
    %v1976 = vsel %vm263, %v1940, %v1948
    %v1977 = vsel %vm263, %v1958, %v1934
    %v1978 = vsel %vm263, %v1960, %v1936
    %v1979 = vsel %vm263, %v1962, %v1938
    %v1980 = vsel %vm263, %v1964, %v1940
    %v1981 = vmul.f32 %v1973, %v196
    %v1982 = vmul.f32 %v1969, %v197
    %v1983 = vmul.f32 %v1965, %v198
    %v1984 = vmul.f32 %v1977, %v199
    %v1985 = vmul.f32 %v1974, %v196
    %v1986 = vmul.f32 %v1970, %v197
    %v1987 = vmul.f32 %v1966, %v198
    %v1988 = vmul.f32 %v1978, %v199
    %v1989 = vmul.f32 %v1975, %v196
    %v1990 = vmul.f32 %v1971, %v197
    %v1991 = vmul.f32 %v1967, %v198
    %v1992 = vmul.f32 %v1979, %v199
    %v1993 = vmul.f32 %v1976, %v196
    %v1994 = vmul.f32 %v1972, %v197
    %v1995 = vmul.f32 %v1968, %v198
    %v1996 = vmul.f32 %v1980, %v199
    %v1997 = vld [vmem:[%s3] sm:$0x3f]
    %v1998 = vpack.c.bf16 %v1633, %v1629
    %v1999 = vpack.c.bf16 %v1634, %v1630
    %v2000 = vpack.c.bf16 %v1635, %v1631
    %v2001 = vpack.c.bf16 %v1636, %v1632
    %v2002 = vpack.c.bf16 %v1641, %v1637
    %v2003 = vpack.c.bf16 %v1642, %v1638
    %v2004 = vpack.c.bf16 %v1643, %v1639
    %v2005 = vpack.c.bf16 %v1644, %v1640
    %v2006 = vpack.c.bf16 %v1649, %v1645
    %v2007 = vpack.c.bf16 %v1650, %v1646
    %v2008 = vpack.c.bf16 %v1651, %v1647
    %v2009 = vpack.c.bf16 %v1652, %v1648
    %v2010 = vpack.c.bf16 %v1657, %v1653
    %v2011 = vpack.c.bf16 %v1658, %v1654
    %v2012 = vpack.c.bf16 %v1659, %v1655
    %v2013 = vpack.c.bf16 %v1660, %v1656
    %v2014 = vpack.c.bf16 %v1713, %v1709
    %v2015 = vpack.c.bf16 %v1714, %v1710
    %v2016 = vpack.c.bf16 %v1715, %v1711
    %v2017 = vpack.c.bf16 %v1716, %v1712
    %v2018 = vpack.c.bf16 %v1721, %v1717
    %v2019 = vpack.c.bf16 %v1722, %v1718
    %v2020 = vpack.c.bf16 %v1723, %v1719
    %v2021 = vpack.c.bf16 %v1724, %v1720
    %v2022 = vpack.c.bf16 %v1777, %v1773
    %v2023 = vpack.c.bf16 %v1778, %v1774
    %v2024 = vpack.c.bf16 %v1779, %v1775
    %v2025 = vpack.c.bf16 %v1780, %v1776
    %v2026 = vpack.c.bf16 %v1785, %v1781
    %v2027 = vpack.c.bf16 %v1786, %v1782
    %v2028 = vpack.c.bf16 %v1787, %v1783
    %v2029 = vpack.c.bf16 %v1788, %v1784
    %v2030 = vpack.c.bf16 %v1473, %v1469
    %v2031 = vpack.c.bf16 %v1474, %v1470
    %v2032 = vpack.c.bf16 %v1475, %v1471
    %v2033 = vpack.c.bf16 %v1476, %v1472
    %v2034 = vpack.c.bf16 %v1481, %v1477
    %v2035 = vpack.c.bf16 %v1482, %v1478
    %v2036 = vpack.c.bf16 %v1483, %v1479
    %v2037 = vpack.c.bf16 %v1484, %v1480
    %v2038 = vpack.c.bf16 %v1841, %v1837
    %v2039 = vpack.c.bf16 %v1842, %v1838
    %v2040 = vpack.c.bf16 %v1843, %v1839
    %v2041 = vpack.c.bf16 %v1844, %v1840
    %v2042 = vpack.c.bf16 %v1849, %v1845
    %v2043 = vpack.c.bf16 %v1850, %v1846
    %v2044 = vpack.c.bf16 %v1851, %v1847
    %v2045 = vpack.c.bf16 %v1852, %v1848
    %v2046 = vpack.c.bf16 %v1905, %v1901
    %v2047 = vpack.c.bf16 %v1906, %v1902
    %v2048 = vpack.c.bf16 %v1907, %v1903
    %v2049 = vpack.c.bf16 %v1908, %v1904
    %v2050 = vpack.c.bf16 %v1913, %v1909
    %v2051 = vpack.c.bf16 %v1914, %v1910
    %v2052 = vpack.c.bf16 %v1915, %v1911
    %v2053 = vpack.c.bf16 %v1916, %v1912
    %v2054 = vpack.c.bf16 %v1921, %v1917
    %v2055 = vpack.c.bf16 %v1922, %v1918
    %v2056 = vpack.c.bf16 %v1923, %v1919
    %v2057 = vpack.c.bf16 %v1924, %v1920
    %v2058 = vpack.c.bf16 %v1929, %v1925
    %v2059 = vpack.c.bf16 %v1930, %v1926
    %v2060 = vpack.c.bf16 %v1931, %v1927
    %v2061 = vpack.c.bf16 %v1932, %v1928
    %v2062 = vpack.c.bf16 %v1985, %v1981
    %v2063 = vpack.c.bf16 %v1986, %v1982
    %v2064 = vpack.c.bf16 %v1987, %v1983
    %v2065 = vpack.c.bf16 %v1988, %v1984
    %v2066 = vpack.c.bf16 %v1993, %v1989
    %v2067 = vpack.c.bf16 %v1994, %v1990
    %v2068 = vpack.c.bf16 %v1995, %v1991
    %v2069 = vpack.c.bf16 %v1996, %v1992
    %v2071 = vcombine.high %v1997, %v1997
    %v2073 = vunpack.c.l.s4 1983009808
    %v2074 = vunpack.c.0.s8 %v2073
    %v2075 = vlaneseq
    %v2076 = vshrl.u32 %v2075, 7
    %v2077 = vsub.s32 %v2074, %v2076
    %v2078 = vrot.slane %v1997, %v2077
    %v2080 = vunpack.c.l.s4 1983009808
    %v2081 = vunpack.c.0.s8 %v2080
    %v2082 = vlaneseq
    %v2083 = vshrl.u32 %v2082, 7
    %v2084 = vsub.s32 %v2081, %v2083
    %v2085 = vrot.slane %v2071, %v2084
    %v2086 = vcombine.high %v2078, %v2078
    %v2090 = vsel %vm1245, %v2085, 0
    %2092 = vmatprep.subr.bf16.mxu0 %v1999
    %2093 = vmatpush1.bf16.msra.mxu0 %v1998
    %2094 = vmatprep.subr.bf16.mxu0 %v2003
    %2095 = vmatpush1.bf16.msra.mxu0 %v2002
    %2096 = vmatprep.subr.bf16.mxu0 %v2007
    %2097 = vmatpush1.bf16.msra.mxu0 %v2006
    %2098 = vmatprep.subr.bf16.mxu0 %v2011
    %2099 = vmatpush1.bf16.msra.mxu0 %v2010
    %2100 = vmatprep.subr.bf16.mxu0 %v2015
    %2101 = vmatpush1.bf16.msra.mxu0 %v2014
    %2102 = vmatprep.subr.bf16.mxu0 %v2019
    %2103 = vmatpush1.bf16.msra.mxu0 %v2018
    %2104 = vmatprep.subr.bf16.mxu0 %v2023
    %2105 = vmatpush1.bf16.msra.mxu0 %v2022
    %2106 = vmatprep.subr.bf16.mxu0 %v2027
    %2107 = vmatpush1.bf16.msra.mxu0 %v2026
    %2108 = vmatprep.subr.bf16.mxu0 %v2031
    %2109 = vmatpush1.bf16.msra.mxu0 %v2030
    %2110 = vmatprep.subr.bf16.mxu0 %v2035
    %2111 = vmatpush1.bf16.msra.mxu0 %v2034
    %2112 = vmatprep.subr.bf16.mxu0 %v2039
    %2113 = vmatpush1.bf16.msra.mxu0 %v2038
    %2114 = vmatprep.subr.bf16.mxu0 %v2043
    %2115 = vmatpush1.bf16.msra.mxu0 %v2042
    %2116 = vmatprep.subr.bf16.mxu0 %v2047
    %2117 = vmatpush1.bf16.msra.mxu0 %v2046
    %2118 = vmatprep.subr.bf16.mxu0 %v2051
    %2119 = vmatpush1.bf16.msra.mxu0 %v2050
    %2120 = vmatprep.subr.bf16.mxu0 %v2055
    %2121 = vmatpush1.bf16.msra.mxu0 %v2054
    %2122 = vmatprep.subr.bf16.mxu0 %v2059
    %2123 = vmatpush1.bf16.msra.mxu0 %v2058
    %2124 = vmatprep.mubr.bf16.mxu0 %v2086
    %2125 = vmatmul.mubr.bf16.gmra.mrb[0].mxu0 %v2078
    %v2126 = vpop.f32.mrb[0].mxu0
    %v2127 = vadd.f32 0.0, %v2126
    %v2128 = vpop.f32.mrb[0].mxu0
    %v2129 = vadd.f32 0.0, %v2128
    %v2130 = vpop.f32.mrb[0].mxu0
    %v2131 = vpop.f32.mrb[0].mxu0
    %2132 = vdwg.mxu0
    %2133 = vmatprep.subr.bf16.mxu0 %v2063
    %2134 = vmatpush1.bf16.msra.mxu0 %v2062
    %2135 = vmatprep.subr.bf16.mxu0 %v2067
    %2136 = vmatpush1.bf16.msra.mxu0 %v2066
    %2137 = vmatprep.subr.bf16.mxu0 %v1255
    %2138 = vmatpush1.bf16.msra.mxu0 %v1255
    %2139 = vmatprep.subr.bf16.mxu0 0
    %2140 = vmatpush1.bf16.msra.mxu0 0
    %2141 = vmatprep.subr.bf16.mxu0 0
    %2142 = vmatpush1.bf16.msra.mxu0 0
    %2143 = vmatprep.subr.bf16.mxu0 0
    %2144 = vmatpush1.bf16.msra.mxu0 0
    %2145 = vmatprep.subr.bf16.mxu0 0
    %2146 = vmatpush1.bf16.msra.mxu0 0
    %2147 = vmatprep.subr.bf16.mxu0 0
    %2148 = vmatpush1.bf16.msra.mxu0 0
    %2149 = vmatprep.subr.bf16.mxu0 0
    %2150 = vmatpush1.bf16.msra.mxu0 0
    %2151 = vmatprep.subr.bf16.mxu0 0
    %2152 = vmatpush1.bf16.msra.mxu0 0
    %2153 = vmatprep.subr.bf16.mxu0 0
    %2154 = vmatpush1.bf16.msra.mxu0 0
    %2155 = vmatprep.subr.bf16.mxu0 0
    %2156 = vmatpush1.bf16.msra.mxu0 0
    %2157 = vmatprep.subr.bf16.mxu0 0
    %2158 = vmatpush1.bf16.msra.mxu0 0
    %2159 = vmatprep.subr.bf16.mxu0 0
    %2160 = vmatpush1.bf16.msra.mxu0 0
    %2161 = vmatprep.subr.bf16.mxu0 0
    %2162 = vmatpush1.bf16.msra.mxu0 0
    %2163 = vmatprep.subr.bf16.mxu0 0
    %2164 = vmatpush1.bf16.msra.mxu0 0
    %2165 = vmatprep.mubr.bf16.mxu0 0
    %2166 = vmatmul.mubr.bf16.gmra.mrb[0].mxu0 %v2090
    %v2167 = vpop.f32.mrb[0].mxu0
    %v2168 = vadd.f32 %v2127, %v2167
    %v2169 = vpop.f32.mrb[0].mxu0
    %v2170 = vadd.f32 %v2129, %v2169
    %v2171 = vpop.f32.mrb[0].mxu0
    %v2172 = vpop.f32.mrb[0].mxu0
    %2173 = vdwg.mxu0
    %2174 = vmatprep.subr.bf16.mxu0 %v2001
    %2175 = vmatpush1.bf16.msra.mxu0 %v2000
    %2176 = vmatprep.subr.bf16.mxu0 %v2005
    %2177 = vmatpush1.bf16.msra.mxu0 %v2004
    %2178 = vmatprep.subr.bf16.mxu0 %v2009
    %2179 = vmatpush1.bf16.msra.mxu0 %v2008
    %2180 = vmatprep.subr.bf16.mxu0 %v2013
    %2181 = vmatpush1.bf16.msra.mxu0 %v2012
    %2182 = vmatprep.subr.bf16.mxu0 %v2017
    %2183 = vmatpush1.bf16.msra.mxu0 %v2016
    %2184 = vmatprep.subr.bf16.mxu0 %v2021
    %2185 = vmatpush1.bf16.msra.mxu0 %v2020
    %2186 = vmatprep.subr.bf16.mxu0 %v2025
    %2187 = vmatpush1.bf16.msra.mxu0 %v2024
    %2188 = vmatprep.subr.bf16.mxu0 %v2029
    %2189 = vmatpush1.bf16.msra.mxu0 %v2028
    %2190 = vmatprep.subr.bf16.mxu0 %v2033
    %2191 = vmatpush1.bf16.msra.mxu0 %v2032
    %2192 = vmatprep.subr.bf16.mxu0 %v2037
    %2193 = vmatpush1.bf16.msra.mxu0 %v2036
    %2194 = vmatprep.subr.bf16.mxu0 %v2041
    %2195 = vmatpush1.bf16.msra.mxu0 %v2040
    %2196 = vmatprep.subr.bf16.mxu0 %v2045
    %2197 = vmatpush1.bf16.msra.mxu0 %v2044
    %2198 = vmatprep.subr.bf16.mxu0 %v2049
    %2199 = vmatpush1.bf16.msra.mxu0 %v2048
    %2200 = vmatprep.subr.bf16.mxu0 %v2053
    %2201 = vmatpush1.bf16.msra.mxu0 %v2052
    %2202 = vmatprep.subr.bf16.mxu0 %v2057
    %2203 = vmatpush1.bf16.msra.mxu0 %v2056
    %2204 = vmatprep.subr.bf16.mxu0 %v2061
    %2205 = vmatpush1.bf16.msra.mxu0 %v2060
    %2206 = vmatprep.mubr.bf16.mxu0 %v2086
    %2207 = vmatmul.mubr.bf16.gmra.mrb[0].mxu0 %v2078
    %v2208 = vpop.f32.mrb[0].mxu0
    %v2209 = vadd.f32 0.0, %v2208
    %v2210 = vpop.f32.mrb[0].mxu0
    %v2211 = vadd.f32 0.0, %v2210
    %v2212 = vpop.f32.mrb[0].mxu0
    %v2213 = vpop.f32.mrb[0].mxu0
    %2214 = vdwg.mxu0
    %2215 = vmatprep.subr.bf16.mxu0 %v2065
    %2216 = vmatpush1.bf16.msra.mxu0 %v2064
    %2217 = vmatprep.subr.bf16.mxu0 %v2069
    %2218 = vmatpush1.bf16.msra.mxu0 %v2068
    %2219 = vmatprep.subr.bf16.mxu0 %v1255
    %2220 = vmatpush1.bf16.msra.mxu0 %v1255
    %2221 = vmatprep.subr.bf16.mxu0 0
    %2222 = vmatpush1.bf16.msra.mxu0 0
    %2223 = vmatprep.subr.bf16.mxu0 0
    %2224 = vmatpush1.bf16.msra.mxu0 0
    %2225 = vmatprep.subr.bf16.mxu0 0
    %2226 = vmatpush1.bf16.msra.mxu0 0
    %2227 = vmatprep.subr.bf16.mxu0 0
    %2228 = vmatpush1.bf16.msra.mxu0 0
    %2229 = vmatprep.subr.bf16.mxu0 0
    %2230 = vmatpush1.bf16.msra.mxu0 0
    %2231 = vmatprep.subr.bf16.mxu0 0
    %2232 = vmatpush1.bf16.msra.mxu0 0
    %2233 = vmatprep.subr.bf16.mxu0 0
    %2234 = vmatpush1.bf16.msra.mxu0 0
    %2235 = vmatprep.subr.bf16.mxu0 0
    %2236 = vmatpush1.bf16.msra.mxu0 0
    %2237 = vmatprep.subr.bf16.mxu0 0
    %2238 = vmatpush1.bf16.msra.mxu0 0
    %2239 = vmatprep.subr.bf16.mxu0 0
    %2240 = vmatpush1.bf16.msra.mxu0 0
    %2241 = vmatprep.subr.bf16.mxu0 0
    %2242 = vmatpush1.bf16.msra.mxu0 0
    %2243 = vmatprep.subr.bf16.mxu0 0
    %2244 = vmatpush1.bf16.msra.mxu0 0
    %2245 = vmatprep.subr.bf16.mxu0 0
    %2246 = vmatpush1.bf16.msra.mxu0 0
    %2247 = vmatprep.mubr.bf16.mxu0 0
    %2248 = vmatmul.mubr.bf16.gmra.mrb[0].mxu0 %v2090
    %v2249 = vpop.f32.mrb[0].mxu0
    %v2250 = vadd.f32 %v2209, %v2249
    %v2251 = vpop.f32.mrb[0].mxu0
    %v2252 = vadd.f32 %v2211, %v2251
    %v2253 = vpop.f32.mrb[0].mxu0
    %v2254 = vpop.f32.mrb[0].mxu0
    %2255 = vdwg.mxu0
    %v2256 = vtanh.pop %v2168
    %v2257 = vtanh.pop %v2170
    %v2258 = vtanh.pop %v2250
    %v2259 = vtanh.pop %v2252
    %v2260 = vld [vmem:[%s4] sm:$0x7]
    %2262 = vset.pattern.permute.xlu0 0
    %2263 = vperm.xlu0 %2262, %v2260
    %v2264 = vpop.permute.xlu0 %2263
    %v2266 = vmul.f32 %v200, %v2264
    %v2267 = vmul.f32 %v201, %v2264
    %v2268 = vmul.f32 %v204, %v2264
    %v2269 = vmul.f32 %v205, %v2264
    %2270 = vset.pattern.permute.xlu0 1
    %2271 = vperm.xlu0 %2270, %v2260
    %v2272 = vpop.permute.xlu0 %2271
    %v2274 = vmul.f32 %v2272, %v2256
    %v2275 = vmul.f32 %v2272, %v2257
    %v2276 = vmul.f32 %v2272, %v2258
    %v2277 = vmul.f32 %v2272, %v2259
    %v2278 = vadd.f32 %v2266, %v2274
    %v2279 = vadd.f32 %v2267, %v2275
    %v2280 = vadd.f32 %v2268, %v2276
    %v2281 = vadd.f32 %v2269, %v2277
    %2282 = vset.pattern.permute.xlu0 2
    %2283 = vperm.xlu0 %2282, %v2260
    %v2284 = vpop.permute.xlu0 %2283
    %v2286 = vadd.f32 %v2278, %v2284
    %v2287 = vadd.f32 %v2279, %v2284
    %v2288 = vadd.f32 %v2280, %v2284
    %v2289 = vadd.f32 %v2281, %v2284
    %v2290 = vmax.f32 %v2286, 0.0
    %v2291 = vmax.f32 %v2287, 0.0
    %v2292 = vmax.f32 %v2288, 0.0
    %v2293 = vmax.f32 %v2289, 0.0
    %v2294 = vmin.f32 %v2290, 1.0
    %v2295 = vmin.f32 %v2291, 1.0
    %v2296 = vmin.f32 %v2292, 1.0
    %v2297 = vmin.f32 %v2293, 1.0
    %v2300 = vrot.slane %v2296, 5
    %v2301 = vrot.slane %v2297, 5
    %v2304 = vsel %vm420, %v2294, %v2300
    %v2305 = vsel %vm420, %v2295, %v2301
    %2306 = vst [vmem:[%s5] sm:$0x3f] %v2304
    %2307 = vst [vmem:[%s5 + $0x8] sm:$0x3f] %v2305
    // Predicated region
    $region26: #{tpu_custom_call.1} parent=1 // pred_check
      _
    $region27: #{tpu_custom_call.1} parent=1 // pred_check_branch
      %2309 = sbr.rel (0) target = $region29
    $region28: #{tpu_custom_call.1} parent=1 // pred_region
      _
    $region29: #{tpu_custom_call.1} parent=1 // pred_fallthru
      _
    // Predicated region
    $region30: #{tpu_custom_call.1} parent=1 // pred_check
      _
    $region31: #{tpu_custom_call.1} parent=1 // pred_check_branch
      %2311 = sbr.rel (0) target = $region33
    $region32: #{tpu_custom_call.1} parent=1 // pred_region
      _
    $region33: #{tpu_custom_call.1} parent=1 // pred_fallthru
      _
    %2312 = vsyncpa [#allocation3], 1

</llo_original>
